<compile_context>
chip_gen: v6e
topology: v6e:2x2x1
jax: 0.10.0
libtpu: 0.0.40
codegen_flags: <defaults>
</compile_context>

<pallas_src>
import jax
import jax.numpy as jnp
from jax.experimental import pallas as pl
from jax.experimental.pallas import tpu as pltpu

# Logical (PyTorch) layer sizes and their lane-padded counterparts.
_SIZES = [(784, 360), (360, 120), (120, 60), (60, 10)]
_PADDED = [(784, 384), (384, 128), (128, 128), (128, 128)]
_TILE_B_MAX = 2048           # ~27 MiB VMEM worst case -> fits every chip with the raised limit
_VMEM_LIMIT = 48 * 1024 * 1024


def _round_up(x, m):
    return ((x + m - 1) // m) * m


def _sigmoid(x):
    # Exactly sigmoid(x); a single EUP tanh per element, mul/add land on the VALU.
    return 0.5 * jnp.tanh(0.5 * x) + 0.5


def mlp_kernel(x_ref,
               w1_ref, b1_ref,
               w2_ref, b2_ref,
               w3_ref, b3_ref,
               w4_ref, b4_ref,
               o_ref):
    # One batch tile per grid step; weights/biases are VMEM-resident (constant index_map).
    x = x_ref[...].astype(jnp.bfloat16)                                # (TB, 784) f32 -> bf16 in-kernel

    z1 = jnp.dot(x, w1_ref[...], preferred_element_type=jnp.float32) + b1_ref[...]
    h1 = _sigmoid(z1).astype(jnp.bfloat16)                             # (TB, 384)

    z2 = jnp.dot(h1, w2_ref[...], preferred_element_type=jnp.float32) + b2_ref[...]
    h2 = _sigmoid(z2).astype(jnp.bfloat16)                             # (TB, 128)

    z3 = jnp.dot(h2, w3_ref[...], preferred_element_type=jnp.float32) + b3_ref[...]
    h3 = _sigmoid(z3).astype(jnp.bfloat16)                             # (TB, 128)

    out = jnp.dot(h3, w4_ref[...], preferred_element_type=jnp.float32) + b4_ref[...]
    o_ref[...] = out.astype(o_ref.dtype)                               # (TB, 128) bf16, lane-dense store


def prepare_params(params):
    """Zero-pad weights/biases to lane-multiple widths once, outside the jitted forward.

    Weights -> bf16 (in, out); biases stay f32 (1, out). Padded hidden lanes produce
    sigmoid(0)=0.5, but the corresponding padded input rows of the next weight matrix
    are zero, so they contribute nothing; padded output columns are exactly zero.
    """
    padded = []
    for idx, ((fi, fo), (pi, po)) in enumerate(zip(_SIZES, _PADDED), start=1):
        w = params[f"w{idx}"].astype(jnp.float32)
        b = params[f"b{idx}"].astype(jnp.float32)
        wp = jnp.zeros((pi, po), jnp.float32).at[:fi, :fo].set(w).astype(jnp.bfloat16)
        bp = jnp.zeros((1, po), jnp.float32).at[:, :fo].set(b)
        padded.append((wp, bp))
    return tuple(padded)


@jax.jit
def all_connect_net_forward(x, padded_params):
    """x: (B, 1, 28, 28) or (B, 784) float32. padded_params: output of prepare_params."""
    B = x.shape[0]
    x2d = x.reshape(B, -1).astype(jnp.float32)
    assert x2d.shape[1] == 784

    # Batch tiling: big tiles to amortize per-step overhead, but at least 2 grid
    # steps for large batches (keeps both v7x TensorCores fed). Multiple of 16
    # (bf16 sublane packing); ragged last tile handled by partial-block masking.
    tile_b = max(16, min(_TILE_B_MAX, _round_up(-(-B // 2), 16)))
    grid = (pl.cdiv(B, tile_b),)

    (w1, b1), (w2, b2), (w3, b3), (w4, b4) = padded_params

    in_specs = [
        pl.BlockSpec((tile_b, 784), lambda i: (i, 0)),      # x: streamed f32 per tile
        pl.BlockSpec((784, 384),    lambda i: (0, 0)),      # weights/biases: resident
        pl.BlockSpec((1, 384),      lambda i: (0, 0)),
        pl.BlockSpec((384, 128),    lambda i: (0, 0)),
        pl.BlockSpec((1, 128),      lambda i: (0, 0)),
        pl.BlockSpec((128, 128),    lambda i: (0, 0)),
        pl.BlockSpec((1, 128),      lambda i: (0, 0)),
        pl.BlockSpec((128, 128),    lambda i: (0, 0)),
        pl.BlockSpec((1, 128),      lambda i: (0, 0)),
    ]
    out_specs = pl.BlockSpec((tile_b, 128), lambda i: (i, 0))

    # Advisory scheduling hint for XLA.
    flops = 2 * B * sum(pi * po for pi, po in _PADDED)
    transcendentals = B * (384 + 128 + 128)                 # one tanh per hidden unit
    bytes_accessed = (B * 784 * 4                           # x (f32)
                      + sum(pi * po * 2 + po * 4 for pi, po in _PADDED)
                      + B * 128 * 2)                        # out (bf16)
    cost = pl.CostEstimate(flops=flops,
                           transcendentals=transcendentals,
                           bytes_accessed=bytes_accessed)

    out_padded = pl.pallas_call(
        mlp_kernel,
        out_shape=jax.ShapeDtypeStruct((B, 128), jnp.bfloat16),
        grid=grid,
        in_specs=in_specs,
        out_specs=out_specs,
        compiler_params=pltpu.CompilerParams(
            dimension_semantics=("parallel",),
            vmem_limit_bytes=_VMEM_LIMIT),
        cost_estimate=cost,
    )(x2d, w1, b1, w2, b2, w3, b3, w4, b4)

    return out_padded[:, :10].astype(jnp.float32)


def init_params(key):
    """Deterministic init mimicking nn.Linear shapes (stored transposed: (in, out))."""
    params = {}
    keys = jax.random.split(key, 2 * len(_SIZES))
    for idx, (fan_in, fan_out) in enumerate(_SIZES):
        bound = 1.0 / jnp.sqrt(fan_in)
        w = jax.random.uniform(keys[2 * idx], (fan_in, fan_out),
                               minval=-bound, maxval=bound, dtype=jnp.float32)
        b = jax.random.uniform(keys[2 * idx + 1], (1, fan_out),
                               minval=-bound, maxval=bound, dtype=jnp.float32)
        params[f"w{idx + 1}"] = w
        params[f"b{idx + 1}"] = b
    return params


def reference_forward(x, params):
    """Pure-JAX reference with matching matmul precision (bf16 inputs, f32 accumulate)."""
    def lin(h, w, b):
        return jnp.dot(h.astype(jnp.bfloat16), w.astype(jnp.bfloat16),
                       preferred_element_type=jnp.float32) + b
    h = x.reshape(x.shape[0], -1).astype(jnp.float32)
    h = jax.nn.sigmoid(lin(h, params["w1"], params["b1"]))
    h = jax.nn.sigmoid(lin(h, params["w2"], params["b2"]))
    h = jax.nn.sigmoid(lin(h, params["w3"], params["b3"]))
    return lin(h, params["w4"], params["b4"])


if __name__ == "__main__":
    key = jax.random.PRNGKey(0)
    k_x, k_p = jax.random.split(key)

    B = 16
    x = jax.random.normal(k_x, (B, 1, 28, 28), dtype=jnp.float32)
    params = init_params(k_p)
    padded_params = prepare_params(params)

    out = all_connect_net_forward(x, padded_params)
    out = jax.block_until_ready(out)

    ref = reference_forward(x, params)
    assert out.shape == (B, 10)
    assert jnp.allclose(out, ref, atol=2e-2, rtol=2e-2), "mismatch vs reference"

    print("KERNEL_OK")
</pallas_src>

<mosaic_0001>
module attributes {stable_mosaic.version = 11 : i64} {
  func.func @mlp_kernel(%arg0: i32, %arg1: memref<16x784xf32, #tpu.memory_space<vmem>>, %arg2: memref<784x384xbf16, #tpu.memory_space<vmem>>, %arg3: memref<1x384xf32, #tpu.memory_space<vmem>>, %arg4: memref<384x128xbf16, #tpu.memory_space<vmem>>, %arg5: memref<1x128xf32, #tpu.memory_space<vmem>>, %arg6: memref<128x128xbf16, #tpu.memory_space<vmem>>, %arg7: memref<1x128xf32, #tpu.memory_space<vmem>>, %arg8: memref<128x128xbf16, #tpu.memory_space<vmem>>, %arg9: memref<1x128xf32, #tpu.memory_space<vmem>>, %arg10: memref<16x128xbf16, #tpu.memory_space<vmem>>) attributes {dimension_semantics = [#tpu.dimension_semantics<parallel>], iteration_bounds = array<i64: 1>, scalar_prefetch = 0 : i64, scratch_operands = 0 : i64, tpu.core_type = #tpu.core_type<tc>, window_params = [{transform_indices = @transform_0, window_bounds = array<i64: 16, 784>}, {pipeline_mode = #tpu.pipeline_mode<synchronous>, transform_indices = @transform_1, window_bounds = array<i64: 784, 384>}, {pipeline_mode = #tpu.pipeline_mode<synchronous>, transform_indices = @transform_2, window_bounds = array<i64: 1, 384>}, {pipeline_mode = #tpu.pipeline_mode<synchronous>, transform_indices = @transform_3, window_bounds = array<i64: 384, 128>}, {pipeline_mode = #tpu.pipeline_mode<synchronous>, transform_indices = @transform_4, window_bounds = array<i64: 1, 128>}, {pipeline_mode = #tpu.pipeline_mode<synchronous>, transform_indices = @transform_5, window_bounds = array<i64: 128, 128>}, {pipeline_mode = #tpu.pipeline_mode<synchronous>, transform_indices = @transform_6, window_bounds = array<i64: 1, 128>}, {pipeline_mode = #tpu.pipeline_mode<synchronous>, transform_indices = @transform_7, window_bounds = array<i64: 128, 128>}, {pipeline_mode = #tpu.pipeline_mode<synchronous>, transform_indices = @transform_8, window_bounds = array<i64: 1, 128>}, {transform_indices = @transform_9, window_bounds = array<i64: 16, 128>}]} {
    %c0 = arith.constant 0 : index
    %c0_0 = arith.constant 0 : index
    %0 = vector.load %arg1[%c0, %c0_0] : memref<16x784xf32, #tpu.memory_space<vmem>>, vector<16x784xf32>
    %1 = arith.truncf %0 : vector<16x784xf32> to vector<16x784xbf16>
    %c0_1 = arith.constant 0 : index
    %c0_2 = arith.constant 0 : index
    %2 = vector.load %arg2[%c0_1, %c0_2] : memref<784x384xbf16, #tpu.memory_space<vmem>>, vector<784x384xbf16>
    %cst = arith.constant dense<0.000000e+00> : vector<16x384xf32>
    %3 = tpu.matmul %1, %2, %cst {dimension_numbers = #tpu.dot_dimension_numbers<[1], [0], [0], [1], [0, 0, 1, 1], [], []>} : vector<16x784xbf16>, vector<784x384xbf16>, vector<16x384xf32> -> vector<16x384xf32>
    %c0_3 = arith.constant 0 : index
    %c0_4 = arith.constant 0 : index
    %4 = vector.load %arg3[%c0_3, %c0_4] : memref<1x384xf32, #tpu.memory_space<vmem>>, vector<1x384xf32>
    %5 = vector.broadcast %4 : vector<1x384xf32> to vector<16x384xf32>
    %6 = arith.addf %3, %5 : vector<16x384xf32>
    %cst_5 = arith.constant 5.000000e-01 : f32
    %7 = vector.broadcast %cst_5 : f32 to vector<16x384xf32>
    %8 = arith.mulf %7, %6 : vector<16x384xf32>
    %9 = math.tanh %8 : vector<16x384xf32>
    %cst_6 = arith.constant 5.000000e-01 : f32
    %10 = vector.broadcast %cst_6 : f32 to vector<16x384xf32>
    %11 = arith.mulf %10, %9 : vector<16x384xf32>
    %cst_7 = arith.constant 5.000000e-01 : f32
    %12 = vector.broadcast %cst_7 : f32 to vector<16x384xf32>
    %13 = arith.addf %11, %12 : vector<16x384xf32>
    %14 = arith.truncf %13 : vector<16x384xf32> to vector<16x384xbf16>
    %c0_8 = arith.constant 0 : index
    %c0_9 = arith.constant 0 : index
    %15 = vector.load %arg4[%c0_8, %c0_9] : memref<384x128xbf16, #tpu.memory_space<vmem>>, vector<384x128xbf16>
    %cst_10 = arith.constant dense<0.000000e+00> : vector<16x128xf32>
    %16 = tpu.matmul %14, %15, %cst_10 {dimension_numbers = #tpu.dot_dimension_numbers<[1], [0], [0], [1], [0, 0, 1, 1], [], []>} : vector<16x384xbf16>, vector<384x128xbf16>, vector<16x128xf32> -> vector<16x128xf32>
    %c0_11 = arith.constant 0 : index
    %c0_12 = arith.constant 0 : index
    %17 = vector.load %arg5[%c0_11, %c0_12] : memref<1x128xf32, #tpu.memory_space<vmem>>, vector<1x128xf32>
    %18 = vector.broadcast %17 : vector<1x128xf32> to vector<16x128xf32>
    %19 = arith.addf %16, %18 : vector<16x128xf32>
    %cst_13 = arith.constant 5.000000e-01 : f32
    %20 = vector.broadcast %cst_13 : f32 to vector<16x128xf32>
    %21 = arith.mulf %20, %19 : vector<16x128xf32>
    %22 = math.tanh %21 : vector<16x128xf32>
    %cst_14 = arith.constant 5.000000e-01 : f32
    %23 = vector.broadcast %cst_14 : f32 to vector<16x128xf32>
    %24 = arith.mulf %23, %22 : vector<16x128xf32>
    %cst_15 = arith.constant 5.000000e-01 : f32
    %25 = vector.broadcast %cst_15 : f32 to vector<16x128xf32>
    %26 = arith.addf %24, %25 : vector<16x128xf32>
    %27 = arith.truncf %26 : vector<16x128xf32> to vector<16x128xbf16>
    %c0_16 = arith.constant 0 : index
    %c0_17 = arith.constant 0 : index
    %28 = vector.load %arg6[%c0_16, %c0_17] : memref<128x128xbf16, #tpu.memory_space<vmem>>, vector<128x128xbf16>
    %cst_18 = arith.constant dense<0.000000e+00> : vector<16x128xf32>
    %29 = tpu.matmul %27, %28, %cst_18 {dimension_numbers = #tpu.dot_dimension_numbers<[1], [0], [0], [1], [0, 0, 1, 1], [], []>} : vector<16x128xbf16>, vector<128x128xbf16>, vector<16x128xf32> -> vector<16x128xf32>
    %c0_19 = arith.constant 0 : index
    %c0_20 = arith.constant 0 : index
    %30 = vector.load %arg7[%c0_19, %c0_20] : memref<1x128xf32, #tpu.memory_space<vmem>>, vector<1x128xf32>
    %31 = vector.broadcast %30 : vector<1x128xf32> to vector<16x128xf32>
    %32 = arith.addf %29, %31 : vector<16x128xf32>
    %cst_21 = arith.constant 5.000000e-01 : f32
    %33 = vector.broadcast %cst_21 : f32 to vector<16x128xf32>
    %34 = arith.mulf %33, %32 : vector<16x128xf32>
    %35 = math.tanh %34 : vector<16x128xf32>
    %cst_22 = arith.constant 5.000000e-01 : f32
    %36 = vector.broadcast %cst_22 : f32 to vector<16x128xf32>
    %37 = arith.mulf %36, %35 : vector<16x128xf32>
    %cst_23 = arith.constant 5.000000e-01 : f32
    %38 = vector.broadcast %cst_23 : f32 to vector<16x128xf32>
    %39 = arith.addf %37, %38 : vector<16x128xf32>
    %40 = arith.truncf %39 : vector<16x128xf32> to vector<16x128xbf16>
    %c0_24 = arith.constant 0 : index
    %c0_25 = arith.constant 0 : index
    %41 = vector.load %arg8[%c0_24, %c0_25] : memref<128x128xbf16, #tpu.memory_space<vmem>>, vector<128x128xbf16>
    %cst_26 = arith.constant dense<0.000000e+00> : vector<16x128xf32>
    %42 = tpu.matmul %40, %41, %cst_26 {dimension_numbers = #tpu.dot_dimension_numbers<[1], [0], [0], [1], [0, 0, 1, 1], [], []>} : vector<16x128xbf16>, vector<128x128xbf16>, vector<16x128xf32> -> vector<16x128xf32>
    %c0_27 = arith.constant 0 : index
    %c0_28 = arith.constant 0 : index
    %43 = vector.load %arg9[%c0_27, %c0_28] : memref<1x128xf32, #tpu.memory_space<vmem>>, vector<1x128xf32>
    %44 = vector.broadcast %43 : vector<1x128xf32> to vector<16x128xf32>
    %45 = arith.addf %42, %44 : vector<16x128xf32>
    %46 = arith.truncf %45 : vector<16x128xf32> to vector<16x128xbf16>
    %c0_29 = arith.constant 0 : index
    %c0_30 = arith.constant 0 : index
    %47 = vector.load %arg10[%c0_29, %c0_30] : memref<16x128xbf16, #tpu.memory_space<vmem>>, vector<16x128xbf16>
    tpu.vector_store %arg10[%c0_29, %c0_30], %46 {strides = array<i32>} : memref<16x128xbf16, #tpu.memory_space<vmem>>, vector<16x128xbf16>,
    return
  }
  func.func @transform_0(%arg0: i32) -> (i32, i32) {
    %c0_i32 = arith.constant 0 : i32
    %c0_i32_0 = arith.constant 0 : i32
    return %arg0, %c0_i32 : i32, i32
  }
  func.func @transform_1(%arg0: i32) -> (i32, i32) {
    %c0_i32 = arith.constant 0 : i32
    %c0_i32_0 = arith.constant 0 : i32
    %c0_i32_1 = arith.constant 0 : i32
    return %c0_i32, %c0_i32_0 : i32, i32
  }
  func.func @transform_2(%arg0: i32) -> (i32, i32) {
    %c0_i32 = arith.constant 0 : i32
    %c0_i32_0 = arith.constant 0 : i32
    %c0_i32_1 = arith.constant 0 : i32
    return %c0_i32, %c0_i32_0 : i32, i32
  }
  func.func @transform_3(%arg0: i32) -> (i32, i32) {
    %c0_i32 = arith.constant 0 : i32
    %c0_i32_0 = arith.constant 0 : i32
    %c0_i32_1 = arith.constant 0 : i32
    return %c0_i32, %c0_i32_0 : i32, i32
  }
  func.func @transform_4(%arg0: i32) -> (i32, i32) {
    %c0_i32 = arith.constant 0 : i32
    %c0_i32_0 = arith.constant 0 : i32
    %c0_i32_1 = arith.constant 0 : i32
    return %c0_i32, %c0_i32_0 : i32, i32
  }
  func.func @transform_5(%arg0: i32) -> (i32, i32) {
    %c0_i32 = arith.constant 0 : i32
    %c0_i32_0 = arith.constant 0 : i32
    %c0_i32_1 = arith.constant 0 : i32
    return %c0_i32, %c0_i32_0 : i32, i32
  }
  func.func @transform_6(%arg0: i32) -> (i32, i32) {
    %c0_i32 = arith.constant 0 : i32
    %c0_i32_0 = arith.constant 0 : i32
    %c0_i32_1 = arith.constant 0 : i32
    return %c0_i32, %c0_i32_0 : i32, i32
  }
  func.func @transform_7(%arg0: i32) -> (i32, i32) {
    %c0_i32 = arith.constant 0 : i32
    %c0_i32_0 = arith.constant 0 : i32
    %c0_i32_1 = arith.constant 0 : i32
    return %c0_i32, %c0_i32_0 : i32, i32
  }
  func.func @transform_8(%arg0: i32) -> (i32, i32) {
    %c0_i32 = arith.constant 0 : i32
    %c0_i32_0 = arith.constant 0 : i32
    %c0_i32_1 = arith.constant 0 : i32
    return %c0_i32, %c0_i32_0 : i32, i32
  }
  func.func @transform_9(%arg0: i32) -> (i32, i32) {
    %c0_i32 = arith.constant 0 : i32
    %c0_i32_0 = arith.constant 0 : i32
    return %arg0, %c0_i32 : i32, i32
  }
}

</mosaic_0001>

<llo_original>
// kernel: all_connect_net_forward.1
$region0: #{all_connect_net_forward.1}
  #allocation0 [shape = 'u32[]', space=smem, size = 0x4, offset = 0x4, fixed_abs, tag = 'smem constant byte address 0x4 - core index']
  #allocation1 [shape = 'u32[144,128]{1,0:T(1,128)}', space=vmem, size = 0x12000, scoped, tag = 'internal scratch']
  %s0 = inlined_call_operand.vmem [shape: f32[16,784], index: 0, kind: input, shape index: {}]
  %s1 = inlined_call_operand.vmem [shape: bf16[784,384], index: 1, kind: input, shape index: {}]
  %s2 = inlined_call_operand.vmem [shape: f32[1,384], index: 2, kind: input, shape index: {}]
  %s3 = inlined_call_operand.vmem [shape: bf16[384,128], index: 3, kind: input, shape index: {}]
  %s4 = inlined_call_operand.vmem [shape: f32[1,128], index: 4, kind: input, shape index: {}]
  %s5 = inlined_call_operand.vmem [shape: bf16[128,128], index: 5, kind: input, shape index: {}]
  %s6 = inlined_call_operand.vmem [shape: f32[1,128], index: 6, kind: input, shape index: {}]
  %s7 = inlined_call_operand.vmem [shape: bf16[128,128], index: 7, kind: input, shape index: {}]
  %s8 = inlined_call_operand.vmem [shape: f32[1,128], index: 8, kind: input, shape index: {}]
  %s9 = inlined_call_operand.vmem [shape: bf16[16,128], index: 9, kind: output, shape index: {}]
  %s10 = sld [smem:[#allocation0]]
  $region46: #{all_connect_net_forward.1} parent=0
    _
  %s12 = ssub.s32 1, %s10
  %s13 = scalar_select 0, %s12, %s10
  // Predicated region
  $region2: #{all_connect_net_forward.1} parent=0 // pred_check
    _
  $region3: #{all_connect_net_forward.1} parent=0 // pred_check_branch
    %15 = sbr.rel (0) target = $region5
  $region4: #{all_connect_net_forward.1} parent=0 // pred_region
    _
  $region5: #{all_connect_net_forward.1} parent=0 // pred_fallthru
    _
  // Predicated region
  $region6: #{all_connect_net_forward.1} parent=0 // pred_check
    _
  $region7: #{all_connect_net_forward.1} parent=0 // pred_check_branch
    %17 = sbr.rel (0) target = $region9
  $region8: #{all_connect_net_forward.1} parent=0 // pred_region
    _
  $region9: #{all_connect_net_forward.1} parent=0 // pred_fallthru
    _
  // Predicated region
  $region10: #{all_connect_net_forward.1} parent=0 // pred_check
    _
  $region11: #{all_connect_net_forward.1} parent=0 // pred_check_branch
    %19 = sbr.rel (0) target = $region13
  $region12: #{all_connect_net_forward.1} parent=0 // pred_region
    _
  $region13: #{all_connect_net_forward.1} parent=0 // pred_fallthru
    _
  // Predicated region
  $region14: #{all_connect_net_forward.1} parent=0 // pred_check
    _
  $region15: #{all_connect_net_forward.1} parent=0 // pred_check_branch
    %21 = sbr.rel (0) target = $region17
  $region16: #{all_connect_net_forward.1} parent=0 // pred_region
    _
  $region17: #{all_connect_net_forward.1} parent=0 // pred_fallthru
    _
  // Predicated region
  $region18: #{all_connect_net_forward.1} parent=0 // pred_check
    _
  $region19: #{all_connect_net_forward.1} parent=0 // pred_check_branch
    %23 = sbr.rel (0) target = $region21
  $region20: #{all_connect_net_forward.1} parent=0 // pred_region
    _
  $region21: #{all_connect_net_forward.1} parent=0 // pred_fallthru
    _
  // Predicated region
  $region22: #{all_connect_net_forward.1} parent=0 // pred_check
    _
  $region23: #{all_connect_net_forward.1} parent=0 // pred_check_branch
    %25 = sbr.rel (0) target = $region25
  $region24: #{all_connect_net_forward.1} parent=0 // pred_region
    _
  $region25: #{all_connect_net_forward.1} parent=0 // pred_fallthru
    _
  // Predicated region
  $region26: #{all_connect_net_forward.1} parent=0 // pred_check
    _
  $region27: #{all_connect_net_forward.1} parent=0 // pred_check_branch
    %27 = sbr.rel (0) target = $region29
  $region28: #{all_connect_net_forward.1} parent=0 // pred_region
    _
  $region29: #{all_connect_net_forward.1} parent=0 // pred_fallthru
    _
  // Predicated region
  $region30: #{all_connect_net_forward.1} parent=0 // pred_check
    _
  $region31: #{all_connect_net_forward.1} parent=0 // pred_check_branch
    %29 = sbr.rel (0) target = $region33
  $region32: #{all_connect_net_forward.1} parent=0 // pred_region
    _
  $region33: #{all_connect_net_forward.1} parent=0 // pred_fallthru
    _
  // Predicated region
  $region34: #{all_connect_net_forward.1} parent=0 // pred_check
    _
  $region35: #{all_connect_net_forward.1} parent=0 // pred_check_branch
    %31 = sbr.rel (0) target = $region37
  $region36: #{all_connect_net_forward.1} parent=0 // pred_region
    _
  $region37: #{all_connect_net_forward.1} parent=0 // pred_fallthru
    _
  %v33 = vld [vmem:[%s0] sm:$0xff]
  %v34 = vld [vmem:[%s0 + $0x8] sm:$0xff]
  %v35 = vld [vmem:[%s0 + $0x10] sm:$0xff]
  %v36 = vld [vmem:[%s0 + $0x18] sm:$0xff]
  %v37 = vld [vmem:[%s0 + $0x20] sm:$0xff]
  %v38 = vld [vmem:[%s0 + $0x28] sm:$0xff]
  %v39 = vld [vmem:[%s0 + $0x30] sm:$0xff]
  %v40 = vld [vmem:[%s0 + $0x38] sm:$0xff]
  %v41 = vld [vmem:[%s0 + $0x40] sm:$0xff]
  %v42 = vld [vmem:[%s0 + $0x48] sm:$0xff]
  %v43 = vld [vmem:[%s0 + $0x50] sm:$0xff]
  %v44 = vld [vmem:[%s0 + $0x58] sm:$0xff]
  %v45 = vld [vmem:[%s0 + $0x60] sm:$0xff]
  %v46 = vld [vmem:[%s0 + $0x68] sm:$0xff]
  %v47 = vpack.c.bf16 %v40, %v33
  %v48 = vpack.c.bf16 %v41, %v34
  %v49 = vpack.c.bf16 %v42, %v35
  %v50 = vpack.c.bf16 %v43, %v36
  %v51 = vpack.c.bf16 %v44, %v37
  %v52 = vpack.c.bf16 %v45, %v38
  %v53 = vpack.c.bf16 %v46, %v39
  %v54 = vld [vmem:[%s1] sm:$0xff]
  %v55 = vld [vmem:[%s1 + $0x8] sm:$0xf]
  %v56 = vld [vmem:[%s1 + $0xc] sm:$0xff]
  %v57 = vld [vmem:[%s1 + $0x14] sm:$0xf]
  %v58 = vld [vmem:[%s1 + $0x18] sm:$0xff]
  %v59 = vld [vmem:[%s1 + $0x20] sm:$0xf]
  %v60 = vld [vmem:[%s1 + $0x24] sm:$0xff]
  %v61 = vld [vmem:[%s1 + $0x2c] sm:$0xf]
  %v62 = vld [vmem:[%s1 + $0x30] sm:$0xff]
  %v63 = vld [vmem:[%s1 + $0x38] sm:$0xf]
  %v64 = vld [vmem:[%s1 + $0x3c] sm:$0xff]
  %v65 = vld [vmem:[%s1 + $0x44] sm:$0xf]
  %v66 = vld [vmem:[%s1 + $0x48] sm:$0xff]
  %v67 = vld [vmem:[%s1 + $0x50] sm:$0xf]
  %v68 = vld [vmem:[%s1 + $0x54] sm:$0xff]
  %v69 = vld [vmem:[%s1 + $0x5c] sm:$0xf]
  %v70 = vld [vmem:[%s1 + $0x60] sm:$0xff]
  %v71 = vld [vmem:[%s1 + $0x68] sm:$0xf]
  %v72 = vld [vmem:[%s1 + $0x6c] sm:$0xff]
  %v73 = vld [vmem:[%s1 + $0x74] sm:$0xf]
  %v74 = vld [vmem:[%s1 + $0x78] sm:$0xff]
  %v75 = vld [vmem:[%s1 + $0x80] sm:$0xf]
  %v76 = vld [vmem:[%s1 + $0x84] sm:$0xff]
  %v77 = vld [vmem:[%s1 + $0x8c] sm:$0xf]
  %v78 = vld [vmem:[%s1 + $0x90] sm:$0xff]
  %v79 = vld [vmem:[%s1 + $0x98] sm:$0xf]
  %v80 = vld [vmem:[%s1 + $0x9c] sm:$0xff]
  %v81 = vld [vmem:[%s1 + $0xa4] sm:$0xf]
  %v82 = vld [vmem:[%s1 + $0xa8] sm:$0xff]
  %v83 = vld [vmem:[%s1 + $0xb0] sm:$0xf]
  %v84 = vld [vmem:[%s1 + $0xb4] sm:$0xff]
  %v85 = vld [vmem:[%s1 + $0xbc] sm:$0xf]
  %v86 = vld [vmem:[%s1 + $0xc0] sm:$0xff]
  %v87 = vld [vmem:[%s1 + $0xc8] sm:$0xf]
  %v88 = vld [vmem:[%s1 + $0xcc] sm:$0xff]
  %v89 = vld [vmem:[%s1 + $0xd4] sm:$0xf]
  %v90 = vld [vmem:[%s1 + $0xd8] sm:$0xff]
  %v91 = vld [vmem:[%s1 + $0xe0] sm:$0xf]
  %v92 = vld [vmem:[%s1 + $0xe4] sm:$0xff]
  %v93 = vld [vmem:[%s1 + $0xec] sm:$0xf]
  %v94 = vld [vmem:[%s1 + $0xf0] sm:$0xff]
  %v95 = vld [vmem:[%s1 + $0xf8] sm:$0xf]
  %v96 = vld [vmem:[%s1 + $0xfc] sm:$0xff]
  %v97 = vld [vmem:[%s1 + $0x104] sm:$0xf]
  %v98 = vld [vmem:[%s1 + $0x108] sm:$0xff]
  %v99 = vld [vmem:[%s1 + $0x110] sm:$0xf]
  %v100 = vld [vmem:[%s1 + $0x114] sm:$0xff]
  %v101 = vld [vmem:[%s1 + $0x11c] sm:$0xf]
  %v102 = vld [vmem:[%s1 + $0x120] sm:$0xff]
  %v103 = vld [vmem:[%s1 + $0x128] sm:$0xf]
  %v104 = vld [vmem:[%s1 + $0x12c] sm:$0xff]
  %v105 = vld [vmem:[%s1 + $0x134] sm:$0xf]
  %v106 = vld [vmem:[%s1 + $0x138] sm:$0xff]
  %v107 = vld [vmem:[%s1 + $0x140] sm:$0xf]
  %v108 = vld [vmem:[%s1 + $0x144] sm:$0xff]
  %v109 = vld [vmem:[%s1 + $0x14c] sm:$0xf]
  %v110 = vld [vmem:[%s1 + $0x150] sm:$0xff]
  %v111 = vld [vmem:[%s1 + $0x158] sm:$0xf]
  %v112 = vld [vmem:[%s1 + $0x15c] sm:$0xff]
  %v113 = vld [vmem:[%s1 + $0x164] sm:$0xf]
  %v114 = vld [vmem:[%s1 + $0x168] sm:$0xff]
  %v115 = vld [vmem:[%s1 + $0x170] sm:$0xf]
  %v116 = vld [vmem:[%s1 + $0x174] sm:$0xff]
  %v117 = vld [vmem:[%s1 + $0x17c] sm:$0xf]
  %v118 = vld [vmem:[%s1 + $0x180] sm:$0xff]
  %v119 = vld [vmem:[%s1 + $0x188] sm:$0xf]
  %v120 = vld [vmem:[%s1 + $0x18c] sm:$0xff]
  %v121 = vld [vmem:[%s1 + $0x194] sm:$0xf]
  %v122 = vld [vmem:[%s1 + $0x198] sm:$0xff]
  %v123 = vld [vmem:[%s1 + $0x1a0] sm:$0xf]
  %v124 = vld [vmem:[%s1 + $0x1a4] sm:$0xff]
  %v125 = vld [vmem:[%s1 + $0x1ac] sm:$0xf]
  %v126 = vld [vmem:[%s1 + $0x1b0] sm:$0xff]
  %v127 = vld [vmem:[%s1 + $0x1b8] sm:$0xf]
  %v128 = vld [vmem:[%s1 + $0x1bc] sm:$0xff]
  %v129 = vld [vmem:[%s1 + $0x1c4] sm:$0xf]
  %v130 = vld [vmem:[%s1 + $0x1c8] sm:$0xff]
  %v131 = vld [vmem:[%s1 + $0x1d0] sm:$0xf]
  %v132 = vld [vmem:[%s1 + $0x1d4] sm:$0xff]
  %v133 = vld [vmem:[%s1 + $0x1dc] sm:$0xf]
  %v134 = vld [vmem:[%s1 + $0x1e0] sm:$0xff]
  %v135 = vld [vmem:[%s1 + $0x1e8] sm:$0xf]
  %v136 = vld [vmem:[%s1 + $0x1ec] sm:$0xff]
  %v137 = vld [vmem:[%s1 + $0x1f4] sm:$0xf]
  %v138 = vld [vmem:[%s1 + $0x1f8] sm:$0xff]
  %v139 = vld [vmem:[%s1 + $0x200] sm:$0xf]
  %v140 = vld [vmem:[%s1 + $0x204] sm:$0xff]
  %v141 = vld [vmem:[%s1 + $0x20c] sm:$0xf]
  %v142 = vld [vmem:[%s1 + $0x210] sm:$0xff]
  %v143 = vld [vmem:[%s1 + $0x218] sm:$0xf]
  %v144 = vld [vmem:[%s1 + $0x21c] sm:$0xff]
  %v145 = vld [vmem:[%s1 + $0x224] sm:$0xf]
  %v146 = vld [vmem:[%s1 + $0x228] sm:$0xff]
  %v147 = vld [vmem:[%s1 + $0x230] sm:$0xf]
  %v148 = vld [vmem:[%s1 + $0x234] sm:$0xff]
  %v149 = vld [vmem:[%s1 + $0x23c] sm:$0xf]
  %v150 = vld [vmem:[%s1 + $0x240] sm:$0xff]
  %v151 = vld [vmem:[%s1 + $0x248] sm:$0xf]
  %v152 = vld [vmem:[%s1 + $0x24c] sm:$0xff]
  %v153 = vld [vmem:[%s1 + $0x254] sm:$0xf]
  %v154 = vld [vmem:[%s1 + $0x258] sm:$0xff]
  %v155 = vld [vmem:[%s1 + $0x260] sm:$0xf]
  %v156 = vld [vmem:[%s1 + $0x264] sm:$0xff]
  %v157 = vld [vmem:[%s1 + $0x26c] sm:$0xf]
  %v158 = vld [vmem:[%s1 + $0x270] sm:$0xff]
  %v159 = vld [vmem:[%s1 + $0x278] sm:$0xf]
  %v160 = vld [vmem:[%s1 + $0x27c] sm:$0xff]
  %v161 = vld [vmem:[%s1 + $0x284] sm:$0xf]
  %v162 = vld [vmem:[%s1 + $0x288] sm:$0xff]
  %v163 = vld [vmem:[%s1 + $0x290] sm:$0xf]
  %v164 = vld [vmem:[%s1 + $0x294] sm:$0xff]
  %v165 = vld [vmem:[%s1 + $0x29c] sm:$0xf]
  %v166 = vld [vmem:[%s1 + $0x2a0] sm:$0xff]
  %v167 = vld [vmem:[%s1 + $0x2a8] sm:$0xf]
  %v168 = vld [vmem:[%s1 + $0x2ac] sm:$0xff]
  %v169 = vld [vmem:[%s1 + $0x2b4] sm:$0xf]
  %v170 = vld [vmem:[%s1 + $0x2b8] sm:$0xff]
  %v171 = vld [vmem:[%s1 + $0x2c0] sm:$0xf]
  %v172 = vld [vmem:[%s1 + $0x2c4] sm:$0xff]
  %v173 = vld [vmem:[%s1 + $0x2cc] sm:$0xf]
  %v174 = vld [vmem:[%s1 + $0x2d0] sm:$0xff]
  %v175 = vld [vmem:[%s1 + $0x2d8] sm:$0xf]
  %v176 = vld [vmem:[%s1 + $0x2dc] sm:$0xff]
  %v177 = vld [vmem:[%s1 + $0x2e4] sm:$0xf]
  %v178 = vld [vmem:[%s1 + $0x2e8] sm:$0xff]
  %v179 = vld [vmem:[%s1 + $0x2f0] sm:$0xf]
  %v180 = vld [vmem:[%s1 + $0x2f4] sm:$0xff]
  %v181 = vld [vmem:[%s1 + $0x2fc] sm:$0xf]
  %v182 = vld [vmem:[%s1 + $0x300] sm:$0xff]
  %v183 = vld [vmem:[%s1 + $0x308] sm:$0xf]
  %v184 = vld [vmem:[%s1 + $0x30c] sm:$0xff]
  %v185 = vld [vmem:[%s1 + $0x314] sm:$0xf]
  %v186 = vld [vmem:[%s1 + $0x318] sm:$0xff]
  %v187 = vld [vmem:[%s1 + $0x320] sm:$0xf]
  %v188 = vld [vmem:[%s1 + $0x324] sm:$0xff]
  %v189 = vld [vmem:[%s1 + $0x32c] sm:$0xf]
  %v190 = vld [vmem:[%s1 + $0x330] sm:$0xff]
  %v191 = vld [vmem:[%s1 + $0x338] sm:$0xf]
  %v192 = vld [vmem:[%s1 + $0x33c] sm:$0xff]
  %v193 = vld [vmem:[%s1 + $0x344] sm:$0xf]
  %v194 = vld [vmem:[%s1 + $0x348] sm:$0xff]
  %v195 = vld [vmem:[%s1 + $0x350] sm:$0xf]
  %v196 = vld [vmem:[%s1 + $0x354] sm:$0xff]
  %v197 = vld [vmem:[%s1 + $0x35c] sm:$0xf]
  %v198 = vld [vmem:[%s1 + $0x360] sm:$0xff]
  %v199 = vld [vmem:[%s1 + $0x368] sm:$0xf]
  %v200 = vld [vmem:[%s1 + $0x36c] sm:$0xff]
  %v201 = vld [vmem:[%s1 + $0x374] sm:$0xf]
  %v202 = vld [vmem:[%s1 + $0x378] sm:$0xff]
  %v203 = vld [vmem:[%s1 + $0x380] sm:$0xf]
  %v204 = vld [vmem:[%s1 + $0x384] sm:$0xff]
  %v205 = vld [vmem:[%s1 + $0x38c] sm:$0xf]
  %v206 = vld [vmem:[%s1 + $0x390] sm:$0xff]
  %v207 = vld [vmem:[%s1 + $0x398] sm:$0xf]
  %v208 = vld [vmem:[%s1 + $0x39c] sm:$0xff]
  %v209 = vld [vmem:[%s1 + $0x3a4] sm:$0xf]
  %v210 = vld [vmem:[%s1 + $0x3a8] sm:$0xff]
  %v211 = vld [vmem:[%s1 + $0x3b0] sm:$0xf]
  %v212 = vld [vmem:[%s1 + $0x3b4] sm:$0xff]
  %v213 = vld [vmem:[%s1 + $0x3bc] sm:$0xf]
  %v214 = vld [vmem:[%s1 + $0x3c0] sm:$0xff]
  %v215 = vld [vmem:[%s1 + $0x3c8] sm:$0xf]
  %v216 = vld [vmem:[%s1 + $0x3cc] sm:$0xff]
  %v217 = vld [vmem:[%s1 + $0x3d4] sm:$0xf]
  %v218 = vld [vmem:[%s1 + $0x3d8] sm:$0xff]
  %v219 = vld [vmem:[%s1 + $0x3e0] sm:$0xf]
  %v220 = vld [vmem:[%s1 + $0x3e4] sm:$0xff]
  %v221 = vld [vmem:[%s1 + $0x3ec] sm:$0xf]
  %v222 = vld [vmem:[%s1 + $0x3f0] sm:$0xff]
  %v223 = vld [vmem:[%s1 + $0x3f8] sm:$0xf]
  %v224 = vld [vmem:[%s1 + $0x3fc] sm:$0xff]
  %v225 = vld [vmem:[%s1 + $0x404] sm:$0xf]
  %v226 = vld [vmem:[%s1 + $0x408] sm:$0xff]
  %v227 = vld [vmem:[%s1 + $0x410] sm:$0xf]
  %v228 = vld [vmem:[%s1 + $0x414] sm:$0xff]
  %v229 = vld [vmem:[%s1 + $0x41c] sm:$0xf]
  %v230 = vld [vmem:[%s1 + $0x420] sm:$0xff]
  %v231 = vld [vmem:[%s1 + $0x428] sm:$0xf]
  %v232 = vld [vmem:[%s1 + $0x42c] sm:$0xff]
  %v233 = vld [vmem:[%s1 + $0x434] sm:$0xf]
  %v234 = vld [vmem:[%s1 + $0x438] sm:$0xff]
  %v235 = vld [vmem:[%s1 + $0x440] sm:$0xf]
  %v236 = vld [vmem:[%s1 + $0x444] sm:$0xff]
  %v237 = vld [vmem:[%s1 + $0x44c] sm:$0xf]
  %v238 = vld [vmem:[%s1 + $0x450] sm:$0xff]
  %v239 = vld [vmem:[%s1 + $0x458] sm:$0xf]
  %v240 = vld [vmem:[%s1 + $0x45c] sm:$0xff]
  %v241 = vld [vmem:[%s1 + $0x464] sm:$0xf]
  %v242 = vld [vmem:[%s1 + $0x468] sm:$0xff]
  %v243 = vld [vmem:[%s1 + $0x470] sm:$0xf]
  %v244 = vld [vmem:[%s1 + $0x474] sm:$0xff]
  %v245 = vld [vmem:[%s1 + $0x47c] sm:$0xf]
  %v246 = vld [vmem:[%s1 + $0x480] sm:$0xff]
  %v247 = vld [vmem:[%s1 + $0x488] sm:$0xf]
  %v248 = vld [vmem:[%s1 + $0x48c] sm:$0xff]
  %v249 = vld [vmem:[%s1 + $0x494] sm:$0xf]
  %v250 = vld [vmem:[%s2] sm:$0x7]
  %v252 = vlaneseq
  %v253 = vshrl.u32 %v252, 7
  %v254 = vsub.s32 0, %v253
  %v255 = vrot.slane %v250, %v254
  %v256 = vlaneseq
  %v257 = vshrl.u32 %v256, 7
  %v258 = vsub.s32 1, %v257
  %v259 = vrot.slane %v250, %v258
  %v260 = vlaneseq
  %v261 = vshrl.u32 %v260, 7
  %v262 = vsub.s32 2, %v261
  %v263 = vrot.slane %v250, %v262
  %v463 = vunpack.c.l.b16 %v54
  %v464 = vunpack.c.h.b16 %v54
  %v465 = vunpack.c.l.b16 %v55
  %v466 = vunpack.c.l.b16 %v56
  %v467 = vunpack.c.h.b16 %v56
  %v468 = vunpack.c.l.b16 %v57
  %v469 = vunpack.c.l.b16 %v58
  %v470 = vunpack.c.h.b16 %v58
  %v471 = vunpack.c.l.b16 %v59
  %v472 = vunpack.c.l.b16 %v60
  %v473 = vunpack.c.h.b16 %v60
  %v474 = vunpack.c.l.b16 %v61
  %v475 = vunpack.c.l.b16 %v62
  %v476 = vunpack.c.h.b16 %v62
  %v477 = vunpack.c.l.b16 %v63
  %v478 = vunpack.c.l.b16 %v64
  %v479 = vunpack.c.h.b16 %v64
  %v480 = vunpack.c.l.b16 %v65
  %v481 = vunpack.c.l.b16 %v66
  %v482 = vunpack.c.h.b16 %v66
  %v483 = vunpack.c.l.b16 %v67
  %v484 = vunpack.c.l.b16 %v68
  %v485 = vunpack.c.h.b16 %v68
  %v486 = vunpack.c.l.b16 %v69
  %v487 = vunpack.c.l.b16 %v70
  %v488 = vunpack.c.h.b16 %v70
  %v489 = vunpack.c.l.b16 %v71
  %v490 = vunpack.c.l.b16 %v72
  %v491 = vunpack.c.h.b16 %v72
  %v492 = vunpack.c.l.b16 %v73
  %v493 = vunpack.c.l.b16 %v74
  %v494 = vunpack.c.h.b16 %v74
  %v495 = vunpack.c.l.b16 %v75
  %v496 = vunpack.c.l.b16 %v76
  %v497 = vunpack.c.h.b16 %v76
  %v498 = vunpack.c.l.b16 %v77
  %v499 = vunpack.c.l.b16 %v78
  %v500 = vunpack.c.h.b16 %v78
  %v501 = vunpack.c.l.b16 %v79
  %v502 = vunpack.c.l.b16 %v80
  %v503 = vunpack.c.h.b16 %v80
  %v504 = vunpack.c.l.b16 %v81
  %v505 = vunpack.c.l.b16 %v82
  %v506 = vunpack.c.h.b16 %v82
  %v507 = vunpack.c.l.b16 %v83
  %v508 = vunpack.c.l.b16 %v84
  %v509 = vunpack.c.h.b16 %v84
  %v510 = vunpack.c.l.b16 %v85
  %v511 = vunpack.c.l.b16 %v86
  %v512 = vunpack.c.h.b16 %v86
  %v513 = vunpack.c.l.b16 %v87
  %v514 = vunpack.c.l.b16 %v88
  %v515 = vunpack.c.h.b16 %v88
  %v516 = vunpack.c.l.b16 %v89
  %v517 = vunpack.c.l.b16 %v90
  %v518 = vunpack.c.h.b16 %v90
  %v519 = vunpack.c.l.b16 %v91
  %v520 = vunpack.c.l.b16 %v92
  %v521 = vunpack.c.h.b16 %v92
  %v522 = vunpack.c.l.b16 %v93
  %v523 = vunpack.c.l.b16 %v94
  %v524 = vunpack.c.h.b16 %v94
  %v525 = vunpack.c.l.b16 %v95
  %v526 = vunpack.c.l.b16 %v96
  %v527 = vunpack.c.h.b16 %v96
  %v528 = vunpack.c.l.b16 %v97
  %v529 = vunpack.c.l.b16 %v98
  %v530 = vunpack.c.h.b16 %v98
  %v531 = vunpack.c.l.b16 %v99
  %v532 = vunpack.c.l.b16 %v100
  %v533 = vunpack.c.h.b16 %v100
  %v534 = vunpack.c.l.b16 %v101
  %v535 = vunpack.c.l.b16 %v102
  %v536 = vunpack.c.h.b16 %v102
  %v537 = vunpack.c.l.b16 %v103
  %v538 = vunpack.c.l.b16 %v104
  %v539 = vunpack.c.h.b16 %v104
  %v540 = vunpack.c.l.b16 %v105
  %v541 = vunpack.c.l.b16 %v106
  %v542 = vunpack.c.h.b16 %v106
  %v543 = vunpack.c.l.b16 %v107
  %v544 = vunpack.c.l.b16 %v108
  %v545 = vunpack.c.h.b16 %v108
  %v546 = vunpack.c.l.b16 %v109
  %v547 = vunpack.c.l.b16 %v110
  %v548 = vunpack.c.h.b16 %v110
  %v549 = vunpack.c.l.b16 %v111
  %v550 = vunpack.c.l.b16 %v112
  %v551 = vunpack.c.h.b16 %v112
  %v552 = vunpack.c.l.b16 %v113
  %v553 = vunpack.c.l.b16 %v114
  %v554 = vunpack.c.h.b16 %v114
  %v555 = vunpack.c.l.b16 %v115
  %v556 = vunpack.c.l.b16 %v116
  %v557 = vunpack.c.h.b16 %v116
  %v558 = vunpack.c.l.b16 %v117
  %v559 = vunpack.c.l.b16 %v118
  %v560 = vunpack.c.h.b16 %v118
  %v561 = vunpack.c.l.b16 %v119
  %v562 = vunpack.c.l.b16 %v120
  %v563 = vunpack.c.h.b16 %v120
  %v564 = vunpack.c.l.b16 %v121
  %v565 = vunpack.c.l.b16 %v122
  %v566 = vunpack.c.h.b16 %v122
  %v567 = vunpack.c.l.b16 %v123
  %v568 = vunpack.c.l.b16 %v124
  %v569 = vunpack.c.h.b16 %v124
  %v570 = vunpack.c.l.b16 %v125
  %v571 = vunpack.c.l.b16 %v126
  %v572 = vunpack.c.h.b16 %v126
  %v573 = vunpack.c.l.b16 %v127
  %v574 = vunpack.c.l.b16 %v128
  %v575 = vunpack.c.h.b16 %v128
  %v576 = vunpack.c.l.b16 %v129
  %v577 = vunpack.c.l.b16 %v130
  %v578 = vunpack.c.h.b16 %v130
  %v579 = vunpack.c.l.b16 %v131
  %v580 = vunpack.c.l.b16 %v132
  %v581 = vunpack.c.h.b16 %v132
  %v582 = vunpack.c.l.b16 %v133
  %v583 = vunpack.c.l.b16 %v134
  %v584 = vunpack.c.h.b16 %v134
  %v585 = vunpack.c.l.b16 %v135
  %v586 = vunpack.c.l.b16 %v136
  %v587 = vunpack.c.h.b16 %v136
  %v588 = vunpack.c.l.b16 %v137
  %v589 = vunpack.c.l.b16 %v138
  %v590 = vunpack.c.h.b16 %v138
  %v591 = vunpack.c.l.b16 %v139
  %v592 = vunpack.c.l.b16 %v140
  %v593 = vunpack.c.h.b16 %v140
  %v594 = vunpack.c.l.b16 %v141
  %v595 = vunpack.c.l.b16 %v142
  %v596 = vunpack.c.h.b16 %v142
  %v597 = vunpack.c.l.b16 %v143
  %v598 = vunpack.c.l.b16 %v144
  %v599 = vunpack.c.h.b16 %v144
  %v600 = vunpack.c.l.b16 %v145
  %v601 = vunpack.c.l.b16 %v146
  %v602 = vunpack.c.h.b16 %v146
  %v603 = vunpack.c.l.b16 %v147
  %v604 = vunpack.c.l.b16 %v148
  %v605 = vunpack.c.h.b16 %v148
  %v606 = vunpack.c.l.b16 %v149
  %v607 = vunpack.c.l.b16 %v150
  %v608 = vunpack.c.h.b16 %v150
  %v609 = vunpack.c.l.b16 %v151
  %v610 = vunpack.c.l.b16 %v152
  %v611 = vunpack.c.h.b16 %v152
  %v612 = vunpack.c.l.b16 %v153
  %v613 = vunpack.c.l.b16 %v154
  %v614 = vunpack.c.h.b16 %v154
  %v615 = vunpack.c.l.b16 %v155
  %v616 = vunpack.c.l.b16 %v156
  %v617 = vunpack.c.h.b16 %v156
  %v618 = vunpack.c.l.b16 %v157
  %v619 = vunpack.c.l.b16 %v158
  %v620 = vunpack.c.h.b16 %v158
  %v621 = vunpack.c.l.b16 %v159
  %v622 = vunpack.c.l.b16 %v160
  %v623 = vunpack.c.h.b16 %v160
  %v624 = vunpack.c.l.b16 %v161
  %v625 = vunpack.c.l.b16 %v162
  %v626 = vunpack.c.h.b16 %v162
  %v627 = vunpack.c.l.b16 %v163
  %v628 = vunpack.c.l.b16 %v164
  %v629 = vunpack.c.h.b16 %v164
  %v630 = vunpack.c.l.b16 %v165
  %v631 = vunpack.c.l.b16 %v166
  %v632 = vunpack.c.h.b16 %v166
  %v633 = vunpack.c.l.b16 %v167
  %v634 = vunpack.c.l.b16 %v168
  %v635 = vunpack.c.h.b16 %v168
  %v636 = vunpack.c.l.b16 %v169
  %v637 = vunpack.c.l.b16 %v170
  %v638 = vunpack.c.h.b16 %v170
  %v639 = vunpack.c.l.b16 %v171
  %v640 = vunpack.c.l.b16 %v172
  %v641 = vunpack.c.h.b16 %v172
  %v642 = vunpack.c.l.b16 %v173
  %v643 = vunpack.c.l.b16 %v174
  %v644 = vunpack.c.h.b16 %v174
  %v645 = vunpack.c.l.b16 %v175
  %v646 = vunpack.c.l.b16 %v176
  %v647 = vunpack.c.h.b16 %v176
  %v648 = vunpack.c.l.b16 %v177
  %v649 = vunpack.c.l.b16 %v178
  %v650 = vunpack.c.h.b16 %v178
  %v651 = vunpack.c.l.b16 %v179
  %v652 = vunpack.c.l.b16 %v180
  %v653 = vunpack.c.h.b16 %v180
  %v654 = vunpack.c.l.b16 %v181
  %v655 = vunpack.c.l.b16 %v182
  %v656 = vunpack.c.h.b16 %v182
  %v657 = vunpack.c.l.b16 %v183
  %v658 = vunpack.c.l.b16 %v184
  %v659 = vunpack.c.h.b16 %v184
  %v660 = vunpack.c.l.b16 %v185
  %v661 = vunpack.c.l.b16 %v186
  %v662 = vunpack.c.h.b16 %v186
  %v663 = vunpack.c.l.b16 %v187
  %v664 = vunpack.c.l.b16 %v188
  %v665 = vunpack.c.h.b16 %v188
  %v666 = vunpack.c.l.b16 %v189
  %v667 = vunpack.c.l.b16 %v190
  %v668 = vunpack.c.h.b16 %v190
  %v669 = vunpack.c.l.b16 %v191
  %v670 = vunpack.c.l.b16 %v192
  %v671 = vunpack.c.h.b16 %v192
  %v672 = vunpack.c.l.b16 %v193
  %v673 = vunpack.c.l.b16 %v194
  %v674 = vunpack.c.h.b16 %v194
  %v675 = vunpack.c.l.b16 %v195
  %v676 = vunpack.c.l.b16 %v196
  %v677 = vunpack.c.h.b16 %v196
  %v678 = vunpack.c.l.b16 %v197
  %v679 = vunpack.c.l.b16 %v198
  %v680 = vunpack.c.h.b16 %v198
  %v681 = vunpack.c.l.b16 %v199
  %v682 = vunpack.c.l.b16 %v200
  %v683 = vunpack.c.h.b16 %v200
  %v684 = vunpack.c.l.b16 %v201
  %v685 = vunpack.c.l.b16 %v202
  %v686 = vunpack.c.h.b16 %v202
  %v687 = vunpack.c.l.b16 %v203
  %v688 = vunpack.c.l.b16 %v204
  %v689 = vunpack.c.h.b16 %v204
  %v690 = vunpack.c.l.b16 %v205
  %v691 = vunpack.c.l.b16 %v206
  %v692 = vunpack.c.h.b16 %v206
  %v693 = vunpack.c.l.b16 %v207
  %v694 = vunpack.c.l.b16 %v208
  %v695 = vunpack.c.h.b16 %v208
  %v696 = vunpack.c.l.b16 %v209
  %v697 = vunpack.c.l.b16 %v210
  %v698 = vunpack.c.h.b16 %v210
  %v699 = vunpack.c.l.b16 %v211
  %v700 = vunpack.c.l.b16 %v212
  %v701 = vunpack.c.h.b16 %v212
  %v702 = vunpack.c.l.b16 %v213
  %v703 = vunpack.c.l.b16 %v214
  %v704 = vunpack.c.h.b16 %v214
  %v705 = vunpack.c.l.b16 %v215
  %v706 = vunpack.c.l.b16 %v216
  %v707 = vunpack.c.h.b16 %v216
  %v708 = vunpack.c.l.b16 %v217
  %v709 = vunpack.c.l.b16 %v218
  %v710 = vunpack.c.h.b16 %v218
  %v711 = vunpack.c.l.b16 %v219
  %v712 = vunpack.c.l.b16 %v220
  %v713 = vunpack.c.h.b16 %v220
  %v714 = vunpack.c.l.b16 %v221
  %v715 = vunpack.c.l.b16 %v222
  %v716 = vunpack.c.h.b16 %v222
  %v717 = vunpack.c.l.b16 %v223
  %v718 = vunpack.c.l.b16 %v224
  %v719 = vunpack.c.h.b16 %v224
  %v720 = vunpack.c.l.b16 %v225
  %v721 = vunpack.c.l.b16 %v226
  %v722 = vunpack.c.h.b16 %v226
  %v723 = vunpack.c.l.b16 %v227
  %v724 = vunpack.c.l.b16 %v228
  %v725 = vunpack.c.h.b16 %v228
  %v726 = vunpack.c.l.b16 %v229
  %v727 = vunpack.c.l.b16 %v230
  %v728 = vunpack.c.h.b16 %v230
  %v729 = vunpack.c.l.b16 %v231
  %v730 = vunpack.c.l.b16 %v232
  %v731 = vunpack.c.h.b16 %v232
  %v732 = vunpack.c.l.b16 %v233
  %v733 = vunpack.c.l.b16 %v234
  %v734 = vunpack.c.h.b16 %v234
  %v735 = vunpack.c.l.b16 %v235
  %v736 = vunpack.c.l.b16 %v236
  %v737 = vunpack.c.h.b16 %v236
  %v738 = vunpack.c.l.b16 %v237
  %v739 = vunpack.c.l.b16 %v238
  %v740 = vunpack.c.h.b16 %v238
  %v741 = vunpack.c.l.b16 %v239
  %v742 = vunpack.c.l.b16 %v240
  %v743 = vunpack.c.h.b16 %v240
  %v744 = vunpack.c.l.b16 %v241
  %v745 = vunpack.c.l.b16 %v242
  %v746 = vunpack.c.h.b16 %v242
  %v747 = vunpack.c.l.b16 %v243
  %v748 = vunpack.c.l.b16 %v244
  %v749 = vunpack.c.h.b16 %v244
  %v750 = vunpack.c.l.b16 %v245
  %v751 = vunpack.c.l.b16 %v246
  %v752 = vunpack.c.h.b16 %v246
  %v753 = vunpack.c.l.b16 %v247
  %v754 = vunpack.c.l.b16 %v248
  %v755 = vunpack.c.h.b16 %v248
  %v756 = vunpack.c.l.b16 %v249
  %v757 = vpack.c.b16 %v466, %v463
  %v758 = vpack.c.b16 %v467, %v464
  %v759 = vpack.c.b16 %v468, %v465
  %v760 = vpack.c.b16 %v472, %v469
  %v761 = vpack.c.b16 %v473, %v470
  %v762 = vpack.c.b16 %v474, %v471
  %v763 = vpack.c.b16 %v478, %v475
  %v764 = vpack.c.b16 %v479, %v476
  %v765 = vpack.c.b16 %v480, %v477
  %v766 = vpack.c.b16 %v484, %v481
  %v767 = vpack.c.b16 %v485, %v482
  %v768 = vpack.c.b16 %v486, %v483
  %v769 = vpack.c.b16 %v490, %v487
  %v770 = vpack.c.b16 %v491, %v488
  %v771 = vpack.c.b16 %v492, %v489
  %v772 = vpack.c.b16 %v496, %v493
  %v773 = vpack.c.b16 %v497, %v494
  %v774 = vpack.c.b16 %v498, %v495
  %v775 = vpack.c.b16 %v502, %v499
  %v776 = vpack.c.b16 %v503, %v500
  %v777 = vpack.c.b16 %v504, %v501
  %v778 = vpack.c.b16 %v508, %v505
  %v779 = vpack.c.b16 %v509, %v506
  %v780 = vpack.c.b16 %v510, %v507
  %v781 = vpack.c.b16 %v514, %v511
  %v782 = vpack.c.b16 %v515, %v512
  %v783 = vpack.c.b16 %v516, %v513
  %v784 = vpack.c.b16 %v520, %v517
  %v785 = vpack.c.b16 %v521, %v518
  %v786 = vpack.c.b16 %v522, %v519
  %v787 = vpack.c.b16 %v526, %v523
  %v788 = vpack.c.b16 %v527, %v524
  %v789 = vpack.c.b16 %v528, %v525
  %v790 = vpack.c.b16 %v532, %v529
  %v791 = vpack.c.b16 %v533, %v530
  %v792 = vpack.c.b16 %v534, %v531
  %v793 = vpack.c.b16 %v538, %v535
  %v794 = vpack.c.b16 %v539, %v536
  %v795 = vpack.c.b16 %v540, %v537
  %v796 = vpack.c.b16 %v544, %v541
  %v797 = vpack.c.b16 %v545, %v542
  %v798 = vpack.c.b16 %v546, %v543
  %v799 = vpack.c.b16 %v550, %v547
  %v800 = vpack.c.b16 %v551, %v548
  %v801 = vpack.c.b16 %v552, %v549
  %v802 = vpack.c.b16 %v556, %v553
  %v803 = vpack.c.b16 %v557, %v554
  %v804 = vpack.c.b16 %v558, %v555
  %v805 = vpack.c.b16 %v562, %v559
  %v806 = vpack.c.b16 %v563, %v560
  %v807 = vpack.c.b16 %v564, %v561
  %v808 = vpack.c.b16 %v568, %v565
  %v809 = vpack.c.b16 %v569, %v566
  %v810 = vpack.c.b16 %v570, %v567
  %v811 = vpack.c.b16 %v574, %v571
  %v812 = vpack.c.b16 %v575, %v572
  %v813 = vpack.c.b16 %v576, %v573
  %v814 = vpack.c.b16 %v580, %v577
  %v815 = vpack.c.b16 %v581, %v578
  %v816 = vpack.c.b16 %v582, %v579
  %v817 = vpack.c.b16 %v586, %v583
  %v818 = vpack.c.b16 %v587, %v584
  %v819 = vpack.c.b16 %v588, %v585
  %v820 = vpack.c.b16 %v592, %v589
  %v821 = vpack.c.b16 %v593, %v590
  %v822 = vpack.c.b16 %v594, %v591
  %v823 = vpack.c.b16 %v598, %v595
  %v824 = vpack.c.b16 %v599, %v596
  %v825 = vpack.c.b16 %v600, %v597
  %v826 = vpack.c.b16 %v604, %v601
  %v827 = vpack.c.b16 %v605, %v602
  %v828 = vpack.c.b16 %v606, %v603
  %v829 = vpack.c.b16 %v610, %v607
  %v830 = vpack.c.b16 %v611, %v608
  %v831 = vpack.c.b16 %v612, %v609
  %v832 = vpack.c.b16 %v616, %v613
  %v833 = vpack.c.b16 %v617, %v614
  %v834 = vpack.c.b16 %v618, %v615
  %v835 = vpack.c.b16 %v622, %v619
  %v836 = vpack.c.b16 %v623, %v620
  %v837 = vpack.c.b16 %v624, %v621
  %v838 = vpack.c.b16 %v628, %v625
  %v839 = vpack.c.b16 %v629, %v626
  %v840 = vpack.c.b16 %v630, %v627
  %v841 = vpack.c.b16 %v634, %v631
  %v842 = vpack.c.b16 %v635, %v632
  %v843 = vpack.c.b16 %v636, %v633
  %v844 = vpack.c.b16 %v640, %v637
  %v845 = vpack.c.b16 %v641, %v638
  %v846 = vpack.c.b16 %v642, %v639
  %v847 = vpack.c.b16 %v646, %v643
  %v848 = vpack.c.b16 %v647, %v644
  %v849 = vpack.c.b16 %v648, %v645
  %v850 = vpack.c.b16 %v652, %v649
  %v851 = vpack.c.b16 %v653, %v650
  %v852 = vpack.c.b16 %v654, %v651
  %v853 = vpack.c.b16 %v658, %v655
  %v854 = vpack.c.b16 %v659, %v656
  %v855 = vpack.c.b16 %v660, %v657
  %v856 = vpack.c.b16 %v664, %v661
  %v857 = vpack.c.b16 %v665, %v662
  %v858 = vpack.c.b16 %v666, %v663
  %v859 = vpack.c.b16 %v670, %v667
  %v860 = vpack.c.b16 %v671, %v668
  %v861 = vpack.c.b16 %v672, %v669
  %v862 = vpack.c.b16 %v676, %v673
  %v863 = vpack.c.b16 %v677, %v674
  %v864 = vpack.c.b16 %v678, %v675
  %v865 = vpack.c.b16 %v682, %v679
  %v866 = vpack.c.b16 %v683, %v680
  %v867 = vpack.c.b16 %v684, %v681
  %v868 = vpack.c.b16 %v688, %v685
  %v869 = vpack.c.b16 %v689, %v686
  %v870 = vpack.c.b16 %v690, %v687
  %v871 = vpack.c.b16 %v694, %v691
  %v872 = vpack.c.b16 %v695, %v692
  %v873 = vpack.c.b16 %v696, %v693
  %v874 = vpack.c.b16 %v700, %v697
  %v875 = vpack.c.b16 %v701, %v698
  %v876 = vpack.c.b16 %v702, %v699
  %v877 = vpack.c.b16 %v706, %v703
  %v878 = vpack.c.b16 %v707, %v704
  %v879 = vpack.c.b16 %v708, %v705
  %v880 = vpack.c.b16 %v712, %v709
  %v881 = vpack.c.b16 %v713, %v710
  %v882 = vpack.c.b16 %v714, %v711
  %v883 = vpack.c.b16 %v718, %v715
  %v884 = vpack.c.b16 %v719, %v716
  %v885 = vpack.c.b16 %v720, %v717
  %v886 = vpack.c.b16 %v724, %v721
  %v887 = vpack.c.b16 %v725, %v722
  %v888 = vpack.c.b16 %v726, %v723
  %v889 = vpack.c.b16 %v730, %v727
  %v890 = vpack.c.b16 %v731, %v728
  %v891 = vpack.c.b16 %v732, %v729
  %v892 = vpack.c.b16 %v736, %v733
  %v893 = vpack.c.b16 %v737, %v734
  %v894 = vpack.c.b16 %v738, %v735
  %v895 = vpack.c.b16 %v742, %v739
  %v896 = vpack.c.b16 %v743, %v740
  %v897 = vpack.c.b16 %v744, %v741
  %v898 = vpack.c.b16 %v748, %v745
  %v899 = vpack.c.b16 %v749, %v746
  %v900 = vpack.c.b16 %v750, %v747
  %v901 = vpack.c.b16 %v754, %v751
  %v902 = vpack.c.b16 %v755, %v752
  %v903 = vpack.c.b16 %v756, %v753
  %vm1051 = vcmask 130048
  %v1053 = vsel %vm1051, %v53, 0
  %1055 = vmatprep.subr.bf16.mxu0 %v779
  %1056 = vmatpush1.bf16.msra.mxu0 %v778
  %1057 = vmatprep.subr.bf16.mxu0 %v776
  %1058 = vmatpush1.bf16.msra.mxu0 %v775
  %1059 = vmatprep.subr.bf16.mxu0 %v773
  %1060 = vmatpush1.bf16.msra.mxu0 %v772
  %1061 = vmatprep.subr.bf16.mxu0 %v770
  %1062 = vmatpush1.bf16.msra.mxu0 %v769
  %1063 = vmatprep.subr.bf16.mxu0 %v767
  %1064 = vmatpush1.bf16.msra.mxu0 %v766
  %1065 = vmatprep.subr.bf16.mxu0 %v764
  %1066 = vmatpush1.bf16.msra.mxu0 %v763
  %1067 = vmatprep.subr.bf16.mxu0 %v761
  %1068 = vmatpush1.bf16.msra.mxu0 %v760
  %1069 = vmatprep.subr.bf16.mxu0 %v758
  %1070 = vmatpush1.bf16.msra.mxu0 %v757
  %1071 = vmatprep.subr.bf16.mxu0 %v803
  %1072 = vmatpush2.bf16.msra.mxu0 %v802
  %1073 = vmatprep.subr.bf16.mxu0 %v800
  %1074 = vmatpush2.bf16.msra.mxu0 %v799
  %1075 = vmatprep.subr.bf16.mxu0 %v797
  %1076 = vmatpush2.bf16.msra.mxu0 %v796
  %1077 = vmatprep.subr.bf16.mxu0 %v794
  %1078 = vmatpush2.bf16.msra.mxu0 %v793
  %1079 = vmatprep.subr.bf16.mxu0 %v791
  %1080 = vmatpush2.bf16.msra.mxu0 %v790
  %1081 = vmatprep.subr.bf16.mxu0 %v788
  %1082 = vmatpush2.bf16.msra.mxu0 %v787
  %1083 = vmatprep.subr.bf16.mxu0 %v785
  %1084 = vmatpush2.bf16.msra.mxu0 %v784
  %1085 = vmatprep.subr.bf16.mxu0 %v782
  %1086 = vmatpush2.bf16.msra.mxu0 %v781
  %1087 = vmatprep.mubr.bf16.mxu0 %v48
  %1088 = vmatmul.mubr.bf16.gmra.mxu0 %v47
  %v1089 = vpop.f32.mrf.mxu0
  %v1090 = vadd.f32 %v255, %v1089
  %v1091 = vpop.f32.mrf.mxu0
  %v1092 = vadd.f32 %v259, %v1091
  %v1093 = vpop.f32.mrf.mxu0
  %v1094 = vadd.f32 %v255, %v1093
  %v1095 = vpop.f32.mrf.mxu0
  %v1096 = vadd.f32 %v259, %v1095
  %1097 = vdwg.mxu0
  %1098 = vmatprep.subr.bf16.mxu0 %v827
  %1099 = vmatpush1.bf16.msra.mxu0 %v826
  %1100 = vmatprep.subr.bf16.mxu0 %v824
  %1101 = vmatpush1.bf16.msra.mxu0 %v823
  %1102 = vmatprep.subr.bf16.mxu0 %v821
  %1103 = vmatpush1.bf16.msra.mxu0 %v820
  %1104 = vmatprep.subr.bf16.mxu0 %v818
  %1105 = vmatpush1.bf16.msra.mxu0 %v817
  %1106 = vmatprep.subr.bf16.mxu0 %v815
  %1107 = vmatpush1.bf16.msra.mxu0 %v814
  %1108 = vmatprep.subr.bf16.mxu0 %v812
  %1109 = vmatpush1.bf16.msra.mxu0 %v811
  %1110 = vmatprep.subr.bf16.mxu0 %v809
  %1111 = vmatpush1.bf16.msra.mxu0 %v808
  %1112 = vmatprep.subr.bf16.mxu0 %v806
  %1113 = vmatpush1.bf16.msra.mxu0 %v805
  %1114 = vmatprep.subr.bf16.mxu0 %v851
  %1115 = vmatpush2.bf16.msra.mxu0 %v850
  %1116 = vmatprep.subr.bf16.mxu0 %v848
  %1117 = vmatpush2.bf16.msra.mxu0 %v847
  %1118 = vmatprep.subr.bf16.mxu0 %v845
  %1119 = vmatpush2.bf16.msra.mxu0 %v844
  %1120 = vmatprep.subr.bf16.mxu0 %v842
  %1121 = vmatpush2.bf16.msra.mxu0 %v841
  %1122 = vmatprep.subr.bf16.mxu0 %v839
  %1123 = vmatpush2.bf16.msra.mxu0 %v838
  %1124 = vmatprep.subr.bf16.mxu0 %v836
  %1125 = vmatpush2.bf16.msra.mxu0 %v835
  %1126 = vmatprep.subr.bf16.mxu0 %v833
  %1127 = vmatpush2.bf16.msra.mxu0 %v832
  %1128 = vmatprep.subr.bf16.mxu0 %v830
  %1129 = vmatpush2.bf16.msra.mxu0 %v829
  %1130 = vmatprep.mubr.bf16.mxu0 %v50
  %1131 = vmatmul.mubr.bf16.gmra.mxu0 %v49
  %v1132 = vpop.f32.mrf.mxu0
  %v1133 = vadd.f32 %v1090, %v1132
  %v1134 = vpop.f32.mrf.mxu0
  %v1135 = vadd.f32 %v1092, %v1134
  %v1136 = vpop.f32.mrf.mxu0
  %v1137 = vadd.f32 %v1094, %v1136
  %v1138 = vpop.f32.mrf.mxu0
  %v1139 = vadd.f32 %v1096, %v1138
  %1140 = vdwg.mxu0
  %1141 = vmatprep.subr.bf16.mxu0 %v875
  %1142 = vmatpush1.bf16.msra.mxu0 %v874
  %1143 = vmatprep.subr.bf16.mxu0 %v872
  %1144 = vmatpush1.bf16.msra.mxu0 %v871
  %1145 = vmatprep.subr.bf16.mxu0 %v869
  %1146 = vmatpush1.bf16.msra.mxu0 %v868
  %1147 = vmatprep.subr.bf16.mxu0 %v866
  %1148 = vmatpush1.bf16.msra.mxu0 %v865
  %1149 = vmatprep.subr.bf16.mxu0 %v863
  %1150 = vmatpush1.bf16.msra.mxu0 %v862
  %1151 = vmatprep.subr.bf16.mxu0 %v860
  %1152 = vmatpush1.bf16.msra.mxu0 %v859
  %1153 = vmatprep.subr.bf16.mxu0 %v857
  %1154 = vmatpush1.bf16.msra.mxu0 %v856
  %1155 = vmatprep.subr.bf16.mxu0 %v854
  %1156 = vmatpush1.bf16.msra.mxu0 %v853
  %1157 = vmatprep.subr.bf16.mxu0 %v899
  %1158 = vmatpush2.bf16.msra.mxu0 %v898
  %1159 = vmatprep.subr.bf16.mxu0 %v896
  %1160 = vmatpush2.bf16.msra.mxu0 %v895
  %1161 = vmatprep.subr.bf16.mxu0 %v893
  %1162 = vmatpush2.bf16.msra.mxu0 %v892
  %1163 = vmatprep.subr.bf16.mxu0 %v890
  %1164 = vmatpush2.bf16.msra.mxu0 %v889
  %1165 = vmatprep.subr.bf16.mxu0 %v887
  %1166 = vmatpush2.bf16.msra.mxu0 %v886
  %1167 = vmatprep.subr.bf16.mxu0 %v884
  %1168 = vmatpush2.bf16.msra.mxu0 %v883
  %1169 = vmatprep.subr.bf16.mxu0 %v881
  %1170 = vmatpush2.bf16.msra.mxu0 %v880
  %1171 = vmatprep.subr.bf16.mxu0 %v878
  %1172 = vmatpush2.bf16.msra.mxu0 %v877
  %1173 = vmatprep.mubr.bf16.mxu0 %v52
  %1174 = vmatmul.mubr.bf16.gmra.mxu0 %v51
  %v1175 = vpop.f32.mrf.mxu0
  %v1176 = vadd.f32 %v1133, %v1175
  %v1177 = vpop.f32.mrf.mxu0
  %v1178 = vadd.f32 %v1135, %v1177
  %v1179 = vpop.f32.mrf.mxu0
  %v1180 = vadd.f32 %v1137, %v1179
  %v1181 = vpop.f32.mrf.mxu0
  %v1182 = vadd.f32 %v1139, %v1181
  %1183 = vdwg.mxu0
  %1184 = vmatprep.subr.bf16.mxu0 0
  %1185 = vmatpush1.bf16.msra.mxu0 0
  %1186 = vmatprep.subr.bf16.mxu0 0
  %1187 = vmatpush1.bf16.msra.mxu0 0
  %1188 = vmatprep.subr.bf16.mxu0 0
  %1189 = vmatpush1.bf16.msra.mxu0 0
  %1190 = vmatprep.subr.bf16.mxu0 0
  %1191 = vmatpush1.bf16.msra.mxu0 0
  %1192 = vmatprep.subr.bf16.mxu0 0
  %1193 = vmatpush1.bf16.msra.mxu0 0
  %1194 = vmatprep.subr.bf16.mxu0 0
  %1195 = vmatpush1.bf16.msra.mxu0 0
  %1196 = vmatprep.subr.bf16.mxu0 0
  %1197 = vmatpush1.bf16.msra.mxu0 0
  %1198 = vmatprep.subr.bf16.mxu0 %v902
  %1199 = vmatpush1.bf16.msra.mxu0 %v901
  %1200 = vmatprep.subr.bf16.mxu0 0
  %1201 = vmatpush2.bf16.msra.mxu0 0
  %1202 = vmatprep.subr.bf16.mxu0 0
  %1203 = vmatpush2.bf16.msra.mxu0 0
  %1204 = vmatprep.subr.bf16.mxu0 0
  %1205 = vmatpush2.bf16.msra.mxu0 0
  %1206 = vmatprep.subr.bf16.mxu0 0
  %1207 = vmatpush2.bf16.msra.mxu0 0
  %1208 = vmatprep.subr.bf16.mxu0 0
  %1209 = vmatpush2.bf16.msra.mxu0 0
  %1210 = vmatprep.subr.bf16.mxu0 0
  %1211 = vmatpush2.bf16.msra.mxu0 0
  %1212 = vmatprep.subr.bf16.mxu0 0
  %1213 = vmatpush2.bf16.msra.mxu0 0
  %1214 = vmatprep.subr.bf16.mxu0 0
  %1215 = vmatpush2.bf16.msra.mxu0 0
  %1216 = vmatprep.mubr.bf16.mxu0 0
  %1217 = vmatmul.mubr.bf16.gmra.mxu0 %v1053
  %v1218 = vpop.f32.mrf.mxu0
  %v1219 = vadd.f32 %v1176, %v1218
  %v1220 = vpop.f32.mrf.mxu0
  %v1221 = vadd.f32 %v1178, %v1220
  %v1222 = vpop.f32.mrf.mxu0
  %v1223 = vadd.f32 %v1180, %v1222
  %v1224 = vpop.f32.mrf.mxu0
  %v1225 = vadd.f32 %v1182, %v1224
  %1226 = vdwg.mxu0
  %1227 = vmatprep.subr.bf16.mxu0 0
  %1228 = vmatpush1.bf16.msra.mxu0 %v780
  %1229 = vmatprep.subr.bf16.mxu0 0
  %1230 = vmatpush1.bf16.msra.mxu0 %v777
  %1231 = vmatprep.subr.bf16.mxu0 0
  %1232 = vmatpush1.bf16.msra.mxu0 %v774
  %1233 = vmatprep.subr.bf16.mxu0 0
  %1234 = vmatpush1.bf16.msra.mxu0 %v771
  %1235 = vmatprep.subr.bf16.mxu0 0
  %1236 = vmatpush1.bf16.msra.mxu0 %v768
  %1237 = vmatprep.subr.bf16.mxu0 0
  %1238 = vmatpush1.bf16.msra.mxu0 %v765
  %1239 = vmatprep.subr.bf16.mxu0 0
  %1240 = vmatpush1.bf16.msra.mxu0 %v762
  %1241 = vmatprep.subr.bf16.mxu0 0
  %1242 = vmatpush1.bf16.msra.mxu0 %v759
  %1243 = vmatprep.subr.bf16.mxu0 0
  %1244 = vmatpush2.bf16.msra.mxu0 %v804
  %1245 = vmatprep.subr.bf16.mxu0 0
  %1246 = vmatpush2.bf16.msra.mxu0 %v801
  %1247 = vmatprep.subr.bf16.mxu0 0
  %1248 = vmatpush2.bf16.msra.mxu0 %v798
  %1249 = vmatprep.subr.bf16.mxu0 0
  %1250 = vmatpush2.bf16.msra.mxu0 %v795
  %1251 = vmatprep.subr.bf16.mxu0 0
  %1252 = vmatpush2.bf16.msra.mxu0 %v792
  %1253 = vmatprep.subr.bf16.mxu0 0
  %1254 = vmatpush2.bf16.msra.mxu0 %v789
  %1255 = vmatprep.subr.bf16.mxu0 0
  %1256 = vmatpush2.bf16.msra.mxu0 %v786
  %1257 = vmatprep.subr.bf16.mxu0 0
  %1258 = vmatpush2.bf16.msra.mxu0 %v783
  %1259 = vmatprep.mubr.bf16.mxu0 %v48
  %1260 = vmatmul.mubr.bf16.gmra.mxu0 %v47
  %v1261 = vpop.f32.mrf.mxu0
  %v1262 = vadd.f32 %v263, %v1261
  %v1263 = vpop.f32.mrf.mxu0
  %v1264 = vpop.f32.mrf.mxu0
  %v1265 = vadd.f32 %v263, %v1264
  %v1266 = vpop.f32.mrf.mxu0
  %1267 = vdwg.mxu0
  %1268 = vmatprep.subr.bf16.mxu0 0
  %1269 = vmatpush1.bf16.msra.mxu0 %v828
  %1270 = vmatprep.subr.bf16.mxu0 0
  %1271 = vmatpush1.bf16.msra.mxu0 %v825
  %1272 = vmatprep.subr.bf16.mxu0 0
  %1273 = vmatpush1.bf16.msra.mxu0 %v822
  %1274 = vmatprep.subr.bf16.mxu0 0
  %1275 = vmatpush1.bf16.msra.mxu0 %v819
  %1276 = vmatprep.subr.bf16.mxu0 0
  %1277 = vmatpush1.bf16.msra.mxu0 %v816
  %1278 = vmatprep.subr.bf16.mxu0 0
  %1279 = vmatpush1.bf16.msra.mxu0 %v813
  %1280 = vmatprep.subr.bf16.mxu0 0
  %1281 = vmatpush1.bf16.msra.mxu0 %v810
  %1282 = vmatprep.subr.bf16.mxu0 0
  %1283 = vmatpush1.bf16.msra.mxu0 %v807
  %1284 = vmatprep.subr.bf16.mxu0 0
  %1285 = vmatpush2.bf16.msra.mxu0 %v852
  %1286 = vmatprep.subr.bf16.mxu0 0
  %1287 = vmatpush2.bf16.msra.mxu0 %v849
  %1288 = vmatprep.subr.bf16.mxu0 0
  %1289 = vmatpush2.bf16.msra.mxu0 %v846
  %1290 = vmatprep.subr.bf16.mxu0 0
  %1291 = vmatpush2.bf16.msra.mxu0 %v843
  %1292 = vmatprep.subr.bf16.mxu0 0
  %1293 = vmatpush2.bf16.msra.mxu0 %v840
  %1294 = vmatprep.subr.bf16.mxu0 0
  %1295 = vmatpush2.bf16.msra.mxu0 %v837
  %1296 = vmatprep.subr.bf16.mxu0 0
  %1297 = vmatpush2.bf16.msra.mxu0 %v834
  %1298 = vmatprep.subr.bf16.mxu0 0
  %1299 = vmatpush2.bf16.msra.mxu0 %v831
  %1300 = vmatprep.mubr.bf16.mxu0 %v50
  %1301 = vmatmul.mubr.bf16.gmra.mxu0 %v49
  %v1302 = vpop.f32.mrf.mxu0
  %v1303 = vadd.f32 %v1262, %v1302
  %v1304 = vpop.f32.mrf.mxu0
  %v1305 = vpop.f32.mrf.mxu0
  %v1306 = vadd.f32 %v1265, %v1305
  %v1307 = vpop.f32.mrf.mxu0
  %1308 = vdwg.mxu0
  %1309 = vmatprep.subr.bf16.mxu0 0
  %1310 = vmatpush1.bf16.msra.mxu0 %v876
  %1311 = vmatprep.subr.bf16.mxu0 0
  %1312 = vmatpush1.bf16.msra.mxu0 %v873
  %1313 = vmatprep.subr.bf16.mxu0 0
  %1314 = vmatpush1.bf16.msra.mxu0 %v870
  %1315 = vmatprep.subr.bf16.mxu0 0
  %1316 = vmatpush1.bf16.msra.mxu0 %v867
  %1317 = vmatprep.subr.bf16.mxu0 0
  %1318 = vmatpush1.bf16.msra.mxu0 %v864
  %1319 = vmatprep.subr.bf16.mxu0 0
  %1320 = vmatpush1.bf16.msra.mxu0 %v861
  %1321 = vmatprep.subr.bf16.mxu0 0
  %1322 = vmatpush1.bf16.msra.mxu0 %v858
  %1323 = vmatprep.subr.bf16.mxu0 0
  %1324 = vmatpush1.bf16.msra.mxu0 %v855
  %1325 = vmatprep.subr.bf16.mxu0 0
  %1326 = vmatpush2.bf16.msra.mxu0 %v900
  %1327 = vmatprep.subr.bf16.mxu0 0
  %1328 = vmatpush2.bf16.msra.mxu0 %v897
  %1329 = vmatprep.subr.bf16.mxu0 0
  %1330 = vmatpush2.bf16.msra.mxu0 %v894
  %1331 = vmatprep.subr.bf16.mxu0 0
  %1332 = vmatpush2.bf16.msra.mxu0 %v891
  %1333 = vmatprep.subr.bf16.mxu0 0
  %1334 = vmatpush2.bf16.msra.mxu0 %v888
  %1335 = vmatprep.subr.bf16.mxu0 0
  %1336 = vmatpush2.bf16.msra.mxu0 %v885
  %1337 = vmatprep.subr.bf16.mxu0 0
  %1338 = vmatpush2.bf16.msra.mxu0 %v882
  %1339 = vmatprep.subr.bf16.mxu0 0
  %1340 = vmatpush2.bf16.msra.mxu0 %v879
  %1341 = vmatprep.mubr.bf16.mxu0 %v52
  %1342 = vmatmul.mubr.bf16.gmra.mxu0 %v51
  %v1343 = vpop.f32.mrf.mxu0
  %v1344 = vadd.f32 %v1303, %v1343
  %v1345 = vpop.f32.mrf.mxu0
  %v1346 = vpop.f32.mrf.mxu0
  %v1347 = vadd.f32 %v1306, %v1346
  %v1348 = vpop.f32.mrf.mxu0
  %1349 = vdwg.mxu0
  %1350 = vmatprep.subr.bf16.mxu0 0
  %1351 = vmatpush1.bf16.msra.mxu0 0
  %1352 = vmatprep.subr.bf16.mxu0 0
  %1353 = vmatpush1.bf16.msra.mxu0 0
  %1354 = vmatprep.subr.bf16.mxu0 0
  %1355 = vmatpush1.bf16.msra.mxu0 0
  %1356 = vmatprep.subr.bf16.mxu0 0
  %1357 = vmatpush1.bf16.msra.mxu0 0
  %1358 = vmatprep.subr.bf16.mxu0 0
  %1359 = vmatpush1.bf16.msra.mxu0 0
  %1360 = vmatprep.subr.bf16.mxu0 0
  %1361 = vmatpush1.bf16.msra.mxu0 0
  %1362 = vmatprep.subr.bf16.mxu0 0
  %1363 = vmatpush1.bf16.msra.mxu0 0
  %1364 = vmatprep.subr.bf16.mxu0 0
  %1365 = vmatpush1.bf16.msra.mxu0 %v903
  %1366 = vmatprep.subr.bf16.mxu0 0
  %1367 = vmatpush2.bf16.msra.mxu0 0
  %1368 = vmatprep.subr.bf16.mxu0 0
  %1369 = vmatpush2.bf16.msra.mxu0 0
  %1370 = vmatprep.subr.bf16.mxu0 0
  %1371 = vmatpush2.bf16.msra.mxu0 0
  %1372 = vmatprep.subr.bf16.mxu0 0
  %1373 = vmatpush2.bf16.msra.mxu0 0
  %1374 = vmatprep.subr.bf16.mxu0 0
  %1375 = vmatpush2.bf16.msra.mxu0 0
  %1376 = vmatprep.subr.bf16.mxu0 0
  %1377 = vmatpush2.bf16.msra.mxu0 0
  %1378 = vmatprep.subr.bf16.mxu0 0
  %1379 = vmatpush2.bf16.msra.mxu0 0
  %1380 = vmatprep.subr.bf16.mxu0 0
  %1381 = vmatpush2.bf16.msra.mxu0 0
  %1382 = vmatprep.mubr.bf16.mxu0 0
  %1383 = vmatmul.mubr.bf16.gmra.mxu0 %v1053
  %v1384 = vpop.f32.mrf.mxu0
  %v1385 = vadd.f32 %v1344, %v1384
  %v1386 = vpop.f32.mrf.mxu0
  %v1387 = vpop.f32.mrf.mxu0
  %v1388 = vadd.f32 %v1347, %v1387
  %v1389 = vpop.f32.mrf.mxu0
  %1390 = vdwg.mxu0
  %v1391 = vmul.f32 %v1219, 0.5
  %v1392 = vmul.f32 %v1221, 0.5
  %v1393 = vmul.f32 %v1385, 0.5
  %v1394 = vmul.f32 %v1223, 0.5
  %v1395 = vmul.f32 %v1225, 0.5
  %v1396 = vmul.f32 %v1388, 0.5
  %v1397 = vtanh.pop %v1391
  %v1398 = vtanh.pop %v1392
  %v1399 = vtanh.pop %v1393
  %v1400 = vtanh.pop %v1394
  %v1401 = vtanh.pop %v1395
  %v1402 = vtanh.pop %v1396
  %v1403 = vmul.f32 %v1397, 0.5
  %v1404 = vmul.f32 %v1398, 0.5
  %v1405 = vmul.f32 %v1399, 0.5
  %v1406 = vmul.f32 %v1400, 0.5
  %v1407 = vmul.f32 %v1401, 0.5
  %v1408 = vmul.f32 %v1402, 0.5
  %v1409 = vadd.f32 %v1403, 0.5
  %v1410 = vadd.f32 %v1404, 0.5
  %v1411 = vadd.f32 %v1405, 0.5
  %v1412 = vadd.f32 %v1406, 0.5
  %v1413 = vadd.f32 %v1407, 0.5
  %v1414 = vadd.f32 %v1408, 0.5
  %v1415 = vpack.c.bf16 %v1412, %v1409
  %v1416 = vpack.c.bf16 %v1413, %v1410
  %v1417 = vpack.c.bf16 %v1414, %v1411
  %v1418 = vld [vmem:[%s3] sm:$0xf]
  %v1419 = vld [vmem:[%s3 + $0x4] sm:$0xf]
  %v1420 = vld [vmem:[%s3 + $0x8] sm:$0xf]
  %v1421 = vld [vmem:[%s3 + $0xc] sm:$0xf]
  %v1422 = vld [vmem:[%s3 + $0x10] sm:$0xf]
  %v1423 = vld [vmem:[%s3 + $0x14] sm:$0xf]
  %v1424 = vld [vmem:[%s3 + $0x18] sm:$0xf]
  %v1425 = vld [vmem:[%s3 + $0x1c] sm:$0xf]
  %v1426 = vld [vmem:[%s3 + $0x20] sm:$0xf]
  %v1427 = vld [vmem:[%s3 + $0x24] sm:$0xf]
  %v1428 = vld [vmem:[%s3 + $0x28] sm:$0xf]
  %v1429 = vld [vmem:[%s3 + $0x2c] sm:$0xf]
  %v1430 = vld [vmem:[%s3 + $0x30] sm:$0xf]
  %v1431 = vld [vmem:[%s3 + $0x34] sm:$0xf]
  %v1432 = vld [vmem:[%s3 + $0x38] sm:$0xf]
  %v1433 = vld [vmem:[%s3 + $0x3c] sm:$0xf]
  %v1434 = vld [vmem:[%s3 + $0x40] sm:$0xf]
  %v1435 = vld [vmem:[%s3 + $0x44] sm:$0xf]
  %v1436 = vld [vmem:[%s3 + $0x48] sm:$0xf]
  %v1437 = vld [vmem:[%s3 + $0x4c] sm:$0xf]
  %v1438 = vld [vmem:[%s3 + $0x50] sm:$0xf]
  %v1439 = vld [vmem:[%s3 + $0x54] sm:$0xf]
  %v1440 = vld [vmem:[%s3 + $0x58] sm:$0xf]
  %v1441 = vld [vmem:[%s3 + $0x5c] sm:$0xf]
  %v1442 = vld [vmem:[%s3 + $0x60] sm:$0xf]
  %v1443 = vld [vmem:[%s3 + $0x64] sm:$0xf]
  %v1444 = vld [vmem:[%s3 + $0x68] sm:$0xf]
  %v1445 = vld [vmem:[%s3 + $0x6c] sm:$0xf]
  %v1446 = vld [vmem:[%s3 + $0x70] sm:$0xf]
  %v1447 = vld [vmem:[%s3 + $0x74] sm:$0xf]
  %v1448 = vld [vmem:[%s3 + $0x78] sm:$0xf]
  %v1449 = vld [vmem:[%s3 + $0x7c] sm:$0xf]
  %v1450 = vld [vmem:[%s3 + $0x80] sm:$0xf]
  %v1451 = vld [vmem:[%s3 + $0x84] sm:$0xf]
  %v1452 = vld [vmem:[%s3 + $0x88] sm:$0xf]
  %v1453 = vld [vmem:[%s3 + $0x8c] sm:$0xf]
  %v1454 = vld [vmem:[%s3 + $0x90] sm:$0xf]
  %v1455 = vld [vmem:[%s3 + $0x94] sm:$0xf]
  %v1456 = vld [vmem:[%s3 + $0x98] sm:$0xf]
  %v1457 = vld [vmem:[%s3 + $0x9c] sm:$0xf]
  %v1458 = vld [vmem:[%s3 + $0xa0] sm:$0xf]
  %v1459 = vld [vmem:[%s3 + $0xa4] sm:$0xf]
  %v1460 = vld [vmem:[%s3 + $0xa8] sm:$0xf]
  %v1461 = vld [vmem:[%s3 + $0xac] sm:$0xf]
  %v1462 = vld [vmem:[%s3 + $0xb0] sm:$0xf]
  %v1463 = vld [vmem:[%s3 + $0xb4] sm:$0xf]
  %v1464 = vld [vmem:[%s3 + $0xb8] sm:$0xf]
  %v1465 = vld [vmem:[%s3 + $0xbc] sm:$0xf]
  %v1466 = vld [vmem:[%s4] sm:$0x1]
  %v1468 = vlaneseq
  %v1469 = vshrl.u32 %v1468, 7
  %v1470 = vsub.s32 0, %v1469
  %v1471 = vrot.slane %v1466, %v1470
  %v1521 = vunpack.c.l.b16 %v1418
  %v1522 = vunpack.c.l.b16 %v1419
  %v1523 = vunpack.c.l.b16 %v1420
  %v1524 = vunpack.c.l.b16 %v1421
  %v1525 = vunpack.c.l.b16 %v1422
  %v1526 = vunpack.c.l.b16 %v1423
  %v1527 = vunpack.c.l.b16 %v1424
  %v1528 = vunpack.c.l.b16 %v1425
  %v1529 = vunpack.c.l.b16 %v1426
  %v1530 = vunpack.c.l.b16 %v1427
  %v1531 = vunpack.c.l.b16 %v1428
  %v1532 = vunpack.c.l.b16 %v1429
  %v1533 = vunpack.c.l.b16 %v1430
  %v1534 = vunpack.c.l.b16 %v1431
  %v1535 = vunpack.c.l.b16 %v1432
  %v1536 = vunpack.c.l.b16 %v1433
  %v1537 = vunpack.c.l.b16 %v1434
  %v1538 = vunpack.c.l.b16 %v1435
  %v1539 = vunpack.c.l.b16 %v1436
  %v1540 = vunpack.c.l.b16 %v1437
  %v1541 = vunpack.c.l.b16 %v1438
  %v1542 = vunpack.c.l.b16 %v1439
  %v1543 = vunpack.c.l.b16 %v1440
  %v1544 = vunpack.c.l.b16 %v1441
  %v1545 = vunpack.c.l.b16 %v1442
  %v1546 = vunpack.c.l.b16 %v1443
  %v1547 = vunpack.c.l.b16 %v1444
  %v1548 = vunpack.c.l.b16 %v1445
  %v1549 = vunpack.c.l.b16 %v1446
  %v1550 = vunpack.c.l.b16 %v1447
  %v1551 = vunpack.c.l.b16 %v1448
  %v1552 = vunpack.c.l.b16 %v1449
  %v1553 = vunpack.c.l.b16 %v1450
  %v1554 = vunpack.c.l.b16 %v1451
  %v1555 = vunpack.c.l.b16 %v1452
  %v1556 = vunpack.c.l.b16 %v1453
  %v1557 = vunpack.c.l.b16 %v1454
  %v1558 = vunpack.c.l.b16 %v1455
  %v1559 = vunpack.c.l.b16 %v1456
  %v1560 = vunpack.c.l.b16 %v1457
  %v1561 = vunpack.c.l.b16 %v1458
  %v1562 = vunpack.c.l.b16 %v1459
  %v1563 = vunpack.c.l.b16 %v1460
  %v1564 = vunpack.c.l.b16 %v1461
  %v1565 = vunpack.c.l.b16 %v1462
  %v1566 = vunpack.c.l.b16 %v1463
  %v1567 = vunpack.c.l.b16 %v1464
  %v1568 = vunpack.c.l.b16 %v1465
  %v1569 = vpack.c.b16 %v1522, %v1521
  %v1570 = vpack.c.b16 %v1524, %v1523
  %v1571 = vpack.c.b16 %v1526, %v1525
  %v1572 = vpack.c.b16 %v1528, %v1527
  %v1573 = vpack.c.b16 %v1530, %v1529
  %v1574 = vpack.c.b16 %v1532, %v1531
  %v1575 = vpack.c.b16 %v1534, %v1533
  %v1576 = vpack.c.b16 %v1536, %v1535
  %v1577 = vpack.c.b16 %v1538, %v1537
  %v1578 = vpack.c.b16 %v1540, %v1539
  %v1579 = vpack.c.b16 %v1542, %v1541
  %v1580 = vpack.c.b16 %v1544, %v1543
  %v1581 = vpack.c.b16 %v1546, %v1545
  %v1582 = vpack.c.b16 %v1548, %v1547
  %v1583 = vpack.c.b16 %v1550, %v1549
  %v1584 = vpack.c.b16 %v1552, %v1551
  %v1585 = vpack.c.b16 %v1554, %v1553
  %v1586 = vpack.c.b16 %v1556, %v1555
  %v1587 = vpack.c.b16 %v1558, %v1557
  %v1588 = vpack.c.b16 %v1560, %v1559
  %v1589 = vpack.c.b16 %v1562, %v1561
  %v1590 = vpack.c.b16 %v1564, %v1563
  %v1591 = vpack.c.b16 %v1566, %v1565
  %v1592 = vpack.c.b16 %v1568, %v1567
  %1617 = vmatprep.subr.bf16.mxu0 0
  %1618 = vmatpush1.bf16.msra.mxu0 %v1576
  %1619 = vmatprep.subr.bf16.mxu0 0
  %1620 = vmatpush1.bf16.msra.mxu0 %v1575
  %1621 = vmatprep.subr.bf16.mxu0 0
  %1622 = vmatpush1.bf16.msra.mxu0 %v1574
  %1623 = vmatprep.subr.bf16.mxu0 0
  %1624 = vmatpush1.bf16.msra.mxu0 %v1573
  %1625 = vmatprep.subr.bf16.mxu0 0
  %1626 = vmatpush1.bf16.msra.mxu0 %v1572
  %1627 = vmatprep.subr.bf16.mxu0 0
  %1628 = vmatpush1.bf16.msra.mxu0 %v1571
  %1629 = vmatprep.subr.bf16.mxu0 0
  %1630 = vmatpush1.bf16.msra.mxu0 %v1570
  %1631 = vmatprep.subr.bf16.mxu0 0
  %1632 = vmatpush1.bf16.msra.mxu0 %v1569
  %1633 = vmatprep.subr.bf16.mxu0 0
  %1634 = vmatpush2.bf16.msra.mxu0 %v1584
  %1635 = vmatprep.subr.bf16.mxu0 0
  %1636 = vmatpush2.bf16.msra.mxu0 %v1583
  %1637 = vmatprep.subr.bf16.mxu0 0
  %1638 = vmatpush2.bf16.msra.mxu0 %v1582
  %1639 = vmatprep.subr.bf16.mxu0 0
  %1640 = vmatpush2.bf16.msra.mxu0 %v1581
  %1641 = vmatprep.subr.bf16.mxu0 0
  %1642 = vmatpush2.bf16.msra.mxu0 %v1580
  %1643 = vmatprep.subr.bf16.mxu0 0
  %1644 = vmatpush2.bf16.msra.mxu0 %v1579
  %1645 = vmatprep.subr.bf16.mxu0 0
  %1646 = vmatpush2.bf16.msra.mxu0 %v1578
  %1647 = vmatprep.subr.bf16.mxu0 0
  %1648 = vmatpush2.bf16.msra.mxu0 %v1577
  %1649 = vmatprep.mubr.bf16.mxu0 %v1416
  %1650 = vmatmul.mubr.bf16.gmra.mxu0 %v1415
  %v1651 = vpop.f32.mrf.mxu0
  %v1652 = vadd.f32 %v1471, %v1651
  %v1653 = vpop.f32.mrf.mxu0
  %v1654 = vpop.f32.mrf.mxu0
  %v1655 = vadd.f32 %v1471, %v1654
  %v1656 = vpop.f32.mrf.mxu0
  %1657 = vdwg.mxu0
  %1658 = vmatprep.subr.bf16.mxu0 0
  %1659 = vmatpush1.bf16.msra.mxu0 %v1592
  %1660 = vmatprep.subr.bf16.mxu0 0
  %1661 = vmatpush1.bf16.msra.mxu0 %v1591
  %1662 = vmatprep.subr.bf16.mxu0 0
  %1663 = vmatpush1.bf16.msra.mxu0 %v1590
  %1664 = vmatprep.subr.bf16.mxu0 0
  %1665 = vmatpush1.bf16.msra.mxu0 %v1589
  %1666 = vmatprep.subr.bf16.mxu0 0
  %1667 = vmatpush1.bf16.msra.mxu0 %v1588
  %1668 = vmatprep.subr.bf16.mxu0 0
  %1669 = vmatpush1.bf16.msra.mxu0 %v1587
  %1670 = vmatprep.subr.bf16.mxu0 0
  %1671 = vmatpush1.bf16.msra.mxu0 %v1586
  %1672 = vmatprep.subr.bf16.mxu0 0
  %1673 = vmatpush1.bf16.msra.mxu0 %v1585
  %1674 = vmatprep.subr.bf16.mxu0 0
  %1675 = vmatpush2.bf16.msra.mxu0 0
  %1676 = vmatprep.subr.bf16.mxu0 0
  %1677 = vmatpush2.bf16.msra.mxu0 0
  %1678 = vmatprep.subr.bf16.mxu0 0
  %1679 = vmatpush2.bf16.msra.mxu0 0
  %1680 = vmatprep.subr.bf16.mxu0 0
  %1681 = vmatpush2.bf16.msra.mxu0 0
  %1682 = vmatprep.subr.bf16.mxu0 0
  %1683 = vmatpush2.bf16.msra.mxu0 0
  %1684 = vmatprep.subr.bf16.mxu0 0
  %1685 = vmatpush2.bf16.msra.mxu0 0
  %1686 = vmatprep.subr.bf16.mxu0 0
  %1687 = vmatpush2.bf16.msra.mxu0 0
  %1688 = vmatprep.subr.bf16.mxu0 0
  %1689 = vmatpush2.bf16.msra.mxu0 0
  %1690 = vmatprep.mubr.bf16.mxu0 0
  %1691 = vmatmul.mubr.bf16.gmra.mxu0 %v1417
  %v1692 = vpop.f32.mrf.mxu0
  %v1693 = vadd.f32 %v1652, %v1692
  %v1694 = vpop.f32.mrf.mxu0
  %v1695 = vpop.f32.mrf.mxu0
  %v1696 = vadd.f32 %v1655, %v1695
  %v1697 = vpop.f32.mrf.mxu0
  %1698 = vdwg.mxu0
  %v1699 = vmul.f32 %v1693, 0.5
  %v1700 = vmul.f32 %v1696, 0.5
  %v1701 = vtanh.pop %v1699
  %v1702 = vtanh.pop %v1700
  %v1703 = vmul.f32 %v1701, 0.5
  %v1704 = vmul.f32 %v1702, 0.5
  %v1705 = vadd.f32 %v1703, 0.5
  %v1706 = vadd.f32 %v1704, 0.5
  %v1707 = vpack.c.bf16 %v1706, %v1705
  %v1708 = vld [vmem:[%s5] sm:$0xf]
  %v1709 = vld [vmem:[%s5 + $0x4] sm:$0xf]
  %v1710 = vld [vmem:[%s5 + $0x8] sm:$0xf]
  %v1711 = vld [vmem:[%s5 + $0xc] sm:$0xf]
  %v1712 = vld [vmem:[%s5 + $0x10] sm:$0xf]
  %v1713 = vld [vmem:[%s5 + $0x14] sm:$0xf]
  %v1714 = vld [vmem:[%s5 + $0x18] sm:$0xf]
  %v1715 = vld [vmem:[%s5 + $0x1c] sm:$0xf]
  %v1716 = vld [vmem:[%s5 + $0x20] sm:$0xf]
  %v1717 = vld [vmem:[%s5 + $0x24] sm:$0xf]
  %v1718 = vld [vmem:[%s5 + $0x28] sm:$0xf]
  %v1719 = vld [vmem:[%s5 + $0x2c] sm:$0xf]
  %v1720 = vld [vmem:[%s5 + $0x30] sm:$0xf]
  %v1721 = vld [vmem:[%s5 + $0x34] sm:$0xf]
  %v1722 = vld [vmem:[%s5 + $0x38] sm:$0xf]
  %v1723 = vld [vmem:[%s5 + $0x3c] sm:$0xf]
  %v1724 = vld [vmem:[%s6] sm:$0x1]
  %v1726 = vlaneseq
  %v1727 = vshrl.u32 %v1726, 7
  %v1728 = vsub.s32 0, %v1727
  %v1729 = vrot.slane %v1724, %v1728
  %v1747 = vunpack.c.l.b16 %v1708
  %v1748 = vunpack.c.l.b16 %v1709
  %v1749 = vunpack.c.l.b16 %v1710
  %v1750 = vunpack.c.l.b16 %v1711
  %v1751 = vunpack.c.l.b16 %v1712
  %v1752 = vunpack.c.l.b16 %v1713
  %v1753 = vunpack.c.l.b16 %v1714
  %v1754 = vunpack.c.l.b16 %v1715
  %v1755 = vunpack.c.l.b16 %v1716
  %v1756 = vunpack.c.l.b16 %v1717
  %v1757 = vunpack.c.l.b16 %v1718
  %v1758 = vunpack.c.l.b16 %v1719
  %v1759 = vunpack.c.l.b16 %v1720
  %v1760 = vunpack.c.l.b16 %v1721
  %v1761 = vunpack.c.l.b16 %v1722
  %v1762 = vunpack.c.l.b16 %v1723
  %v1763 = vpack.c.b16 %v1748, %v1747
  %v1764 = vpack.c.b16 %v1750, %v1749
  %v1765 = vpack.c.b16 %v1752, %v1751
  %v1766 = vpack.c.b16 %v1754, %v1753
  %v1767 = vpack.c.b16 %v1756, %v1755
  %v1768 = vpack.c.b16 %v1758, %v1757
  %v1769 = vpack.c.b16 %v1760, %v1759
  %v1770 = vpack.c.b16 %v1762, %v1761
  %1779 = vmatprep.subr.bf16.mxu0 0
  %1780 = vmatpush1.bf16.msra.mxu0 %v1770
  %1781 = vmatprep.subr.bf16.mxu0 0
  %1782 = vmatpush1.bf16.msra.mxu0 %v1769
  %1783 = vmatprep.subr.bf16.mxu0 0
  %1784 = vmatpush1.bf16.msra.mxu0 %v1768
  %1785 = vmatprep.subr.bf16.mxu0 0
  %1786 = vmatpush1.bf16.msra.mxu0 %v1767
  %1787 = vmatprep.subr.bf16.mxu0 0
  %1788 = vmatpush1.bf16.msra.mxu0 %v1766
  %1789 = vmatprep.subr.bf16.mxu0 0
  %1790 = vmatpush1.bf16.msra.mxu0 %v1765
  %1791 = vmatprep.subr.bf16.mxu0 0
  %1792 = vmatpush1.bf16.msra.mxu0 %v1764
  %1793 = vmatprep.subr.bf16.mxu0 0
  %1794 = vmatpush1.bf16.msra.mxu0 %v1763
  %1795 = vmatprep.subr.bf16.mxu0 0
  %1796 = vmatpush2.bf16.msra.mxu0 0
  %1797 = vmatprep.subr.bf16.mxu0 0
  %1798 = vmatpush2.bf16.msra.mxu0 0
  %1799 = vmatprep.subr.bf16.mxu0 0
  %1800 = vmatpush2.bf16.msra.mxu0 0
  %1801 = vmatprep.subr.bf16.mxu0 0
  %1802 = vmatpush2.bf16.msra.mxu0 0
  %1803 = vmatprep.subr.bf16.mxu0 0
  %1804 = vmatpush2.bf16.msra.mxu0 0
  %1805 = vmatprep.subr.bf16.mxu0 0
  %1806 = vmatpush2.bf16.msra.mxu0 0
  %1807 = vmatprep.subr.bf16.mxu0 0
  %1808 = vmatpush2.bf16.msra.mxu0 0
  %1809 = vmatprep.subr.bf16.mxu0 0
  %1810 = vmatpush2.bf16.msra.mxu0 0
  %1811 = vmatprep.mubr.bf16.mxu0 0
  %1812 = vmatmul.mubr.bf16.gmra.mxu0 %v1707
  %v1813 = vpop.f32.mrf.mxu0
  %v1814 = vadd.f32 %v1729, %v1813
  %v1815 = vpop.f32.mrf.mxu0
  %v1816 = vpop.f32.mrf.mxu0
  %v1817 = vadd.f32 %v1729, %v1816
  %v1818 = vpop.f32.mrf.mxu0
  %1819 = vdwg.mxu0
  %v1820 = vmul.f32 %v1814, 0.5
  %v1821 = vmul.f32 %v1817, 0.5
  %v1822 = vtanh.pop %v1820
  %v1823 = vtanh.pop %v1821
  %v1824 = vmul.f32 %v1822, 0.5
  %v1825 = vmul.f32 %v1823, 0.5
  %v1826 = vadd.f32 %v1824, 0.5
  %v1827 = vadd.f32 %v1825, 0.5
  %v1828 = vpack.c.bf16 %v1827, %v1826
  %v1829 = vld [vmem:[%s7] sm:$0xf]
  %v1830 = vld [vmem:[%s7 + $0x4] sm:$0xf]
  %v1831 = vld [vmem:[%s7 + $0x8] sm:$0xf]
  %v1832 = vld [vmem:[%s7 + $0xc] sm:$0xf]
  %v1833 = vld [vmem:[%s7 + $0x10] sm:$0xf]
  %v1834 = vld [vmem:[%s7 + $0x14] sm:$0xf]
  %v1835 = vld [vmem:[%s7 + $0x18] sm:$0xf]
  %v1836 = vld [vmem:[%s7 + $0x1c] sm:$0xf]
  %v1837 = vld [vmem:[%s7 + $0x20] sm:$0xf]
  %v1838 = vld [vmem:[%s7 + $0x24] sm:$0xf]
  %v1839 = vld [vmem:[%s7 + $0x28] sm:$0xf]
  %v1840 = vld [vmem:[%s7 + $0x2c] sm:$0xf]
  %v1841 = vld [vmem:[%s7 + $0x30] sm:$0xf]
  %v1842 = vld [vmem:[%s7 + $0x34] sm:$0xf]
  %v1843 = vld [vmem:[%s7 + $0x38] sm:$0xf]
  %v1844 = vld [vmem:[%s7 + $0x3c] sm:$0xf]
  %v1845 = vld [vmem:[%s8] sm:$0x1]
  %v1847 = vlaneseq
  %v1848 = vshrl.u32 %v1847, 7
  %v1849 = vsub.s32 0, %v1848
  %v1850 = vrot.slane %v1845, %v1849
  %v1868 = vunpack.c.l.b16 %v1829
  %v1869 = vunpack.c.l.b16 %v1830
  %v1870 = vunpack.c.l.b16 %v1831
  %v1871 = vunpack.c.l.b16 %v1832
  %v1872 = vunpack.c.l.b16 %v1833
  %v1873 = vunpack.c.l.b16 %v1834
  %v1874 = vunpack.c.l.b16 %v1835
  %v1875 = vunpack.c.l.b16 %v1836
  %v1876 = vunpack.c.l.b16 %v1837
  %v1877 = vunpack.c.l.b16 %v1838
  %v1878 = vunpack.c.l.b16 %v1839
  %v1879 = vunpack.c.l.b16 %v1840
  %v1880 = vunpack.c.l.b16 %v1841
  %v1881 = vunpack.c.l.b16 %v1842
  %v1882 = vunpack.c.l.b16 %v1843
  %v1883 = vunpack.c.l.b16 %v1844
  %v1884 = vpack.c.b16 %v1869, %v1868
  %v1885 = vpack.c.b16 %v1871, %v1870
  %v1886 = vpack.c.b16 %v1873, %v1872
  %v1887 = vpack.c.b16 %v1875, %v1874
  %v1888 = vpack.c.b16 %v1877, %v1876
  %v1889 = vpack.c.b16 %v1879, %v1878
  %v1890 = vpack.c.b16 %v1881, %v1880
  %v1891 = vpack.c.b16 %v1883, %v1882
  %1900 = vmatprep.subr.bf16.mxu0 0
  %1901 = vmatpush1.bf16.msra.mxu0 %v1891
  %1902 = vmatprep.subr.bf16.mxu0 0
  %1903 = vmatpush1.bf16.msra.mxu0 %v1890
  %1904 = vmatprep.subr.bf16.mxu0 0
  %1905 = vmatpush1.bf16.msra.mxu0 %v1889
  %1906 = vmatprep.subr.bf16.mxu0 0
  %1907 = vmatpush1.bf16.msra.mxu0 %v1888
  %1908 = vmatprep.subr.bf16.mxu0 0
  %1909 = vmatpush1.bf16.msra.mxu0 %v1887
  %1910 = vmatprep.subr.bf16.mxu0 0
  %1911 = vmatpush1.bf16.msra.mxu0 %v1886
  %1912 = vmatprep.subr.bf16.mxu0 0
  %1913 = vmatpush1.bf16.msra.mxu0 %v1885
  %1914 = vmatprep.subr.bf16.mxu0 0
  %1915 = vmatpush1.bf16.msra.mxu0 %v1884
  %1916 = vmatprep.subr.bf16.mxu0 0
  %1917 = vmatpush2.bf16.msra.mxu0 0
  %1918 = vmatprep.subr.bf16.mxu0 0
  %1919 = vmatpush2.bf16.msra.mxu0 0
  %1920 = vmatprep.subr.bf16.mxu0 0
  %1921 = vmatpush2.bf16.msra.mxu0 0
  %1922 = vmatprep.subr.bf16.mxu0 0
  %1923 = vmatpush2.bf16.msra.mxu0 0
  %1924 = vmatprep.subr.bf16.mxu0 0
  %1925 = vmatpush2.bf16.msra.mxu0 0
  %1926 = vmatprep.subr.bf16.mxu0 0
  %1927 = vmatpush2.bf16.msra.mxu0 0
  %1928 = vmatprep.subr.bf16.mxu0 0
  %1929 = vmatpush2.bf16.msra.mxu0 0
  %1930 = vmatprep.subr.bf16.mxu0 0
  %1931 = vmatpush2.bf16.msra.mxu0 0
  %1932 = vmatprep.mubr.bf16.mxu0 0
  %1933 = vmatmul.mubr.bf16.gmra.mxu0 %v1828
  %v1934 = vpop.f32.mrf.mxu0
  %v1935 = vadd.f32 %v1850, %v1934
  %v1936 = vpop.f32.mrf.mxu0
  %v1937 = vpop.f32.mrf.mxu0
  %v1938 = vadd.f32 %v1850, %v1937
  %v1939 = vpop.f32.mrf.mxu0
  %1940 = vdwg.mxu0
  %v1941 = vpack.c.bf16 %v1938, %v1935
  %v1943 = vunpack.c.l.b16 %v1941
  %v1944 = vunpack.c.h.b16 %v1941
  %v1945 = vpack.c.b16 %v1943, %v1943
  %v1946 = vpack.c.b16 %v1944, %v1944
  %1949 = vst [vmem:[%s9] sm:$0xf] %v1945
  %1950 = vst [vmem:[%s9 + $0x4] sm:$0xf] %v1946
  // Predicated region
  $region38: #{all_connect_net_forward.1} parent=0 // pred_check
    _
  $region39: #{all_connect_net_forward.1} parent=0 // pred_check_branch
    %1952 = sbr.rel (0) target = $region41
  $region40: #{all_connect_net_forward.1} parent=0 // pred_region
    _
  $region41: #{all_connect_net_forward.1} parent=0 // pred_fallthru
    _
  // Predicated region
  $region42: #{all_connect_net_forward.1} parent=0 // pred_check
    _
  $region43: #{all_connect_net_forward.1} parent=0 // pred_check_branch
    %1954 = sbr.rel (0) target = $region45
  $region44: #{all_connect_net_forward.1} parent=0 // pred_region
    _
  $region45: #{all_connect_net_forward.1} parent=0 // pred_fallthru
    _

</llo_original>
